<compile_context>
chip_gen: v6e
topology: v6e:2x2x1
jax: 0.10.0
libtpu: 0.0.40
codegen_flags: <defaults>
</compile_context>

<pallas_src>
import functools

import jax
import jax.numpy as jnp
from jax import lax
from jax.experimental import pallas as pl
from jax.experimental.pallas import tpu as pltpu


def _ensemble_kernel(x_ref, w1_ref, b1_ref, w2_ref, b2_ref, o_ref, y_scratch,
                     *, mb, hidden, outp_dim):
    # x_ref : (B, inp_dim)             bf16  -- same block every grid step
    # w1_ref: (inp_dim, MB*hidden)     bf16  -- MB models' first layers, fused
    # b1_ref: (1, MB*hidden)           f32
    # w2_ref: (MB, outp_dim, hidden)   bf16  -- lane-dense (last dim = hidden)
    # b2_ref: (1, MB*outp_dim)         f32
    # o_ref : (1, B, MB*outp_dim)            -- lane-dense output slab
    # y_scratch: (B, MB*outp_dim)      f32 VMEM scratch
    x = x_ref[...]

    # Layer 1: one wide matmul for all MB models (fills the MXU columns).
    h = jnp.dot(x, w1_ref[...], preferred_element_type=jnp.float32)  # (B, MB*H)
    h = jnp.maximum(h + b1_ref[...], 0.0)
    h = h.astype(jnp.bfloat16)

    # Layer 2: per-model matmul, contracting over hidden (last dim of w2_ref[m]).
    # Results land in the f32 scratch at static lane offsets (no concatenate).
    for m in range(mb):
        hm = h[:, m * hidden:(m + 1) * hidden]                        # (B, H)
        ym = lax.dot_general(hm, w2_ref[m],
                             dimension_numbers=(((1,), (1,)), ((), ())),
                             preferred_element_type=jnp.float32)      # (B, OUT)
        y_scratch[:, m * outp_dim:(m + 1) * outp_dim] = ym

    # Single lane-dense store with the bias folded into the epilogue.
    o_ref[0] = (y_scratch[...] + b2_ref[...]).astype(o_ref.dtype)


def _default_model_block(n_models):
    """Pick the per-grid-step model count based on TensorCores per chip."""
    two_tc = False
    try:
        kind = jax.devices()[0].device_kind.lower()
        two_tc = "v7" in kind          # v7x: 2 TensorCores per chip
    except Exception:
        pass
    if two_tc and n_models % 2 == 0:
        return n_models // 2           # even grid -> both TCs busy
    return n_models                    # single-TC chips: grid=(1,), no overhead


def prepare_ensemble_params(w1, b1, w2, b2, *, mb, compute_dtype=jnp.bfloat16):
    """One-time weight relayout/cast (hoisted out of the per-call path).

    w1: (n_models, inp_dim, hidden)   b1: (n_models, hidden)
    w2: (n_models, hidden, outp_dim)  b2: (n_models, outp_dim)
    """
    n_models, inp_dim, hidden = w1.shape
    outp_dim = w2.shape[-1]
    assert n_models % mb == 0, "n_models must be divisible by the model block"

    # W1 laid out lane-dense: column block m*hidden:(m+1)*hidden == model m.
    w1_wide = (jnp.transpose(w1, (1, 0, 2))
               .reshape(inp_dim, n_models * hidden)
               .astype(compute_dtype))
    b1_wide = b1.reshape(1, n_models * hidden).astype(jnp.float32)
    # W2 lane-dense: (n_models, outp_dim, hidden) -- last dim is 128-wide.
    w2_t = jnp.transpose(w2, (0, 2, 1)).astype(compute_dtype)
    b2_wide = b2.reshape(1, n_models * outp_dim).astype(jnp.float32)
    return w1_wide, b1_wide, w2_t, b2_wide


def ensemble_forward(x, prepared, *, n_models, mb,
                     compute_dtype=jnp.bfloat16):
    """Runs all ensemble members and stacks predictions along dim 0.

    x : (B, inp_dim); `prepared` comes from prepare_ensemble_params.
    returns (n_models, B, outp_dim)   == torch.stack(preds, dim=0)
    """
    w1_wide, b1_wide, w2_t, b2_wide = prepared
    inp_dim = w1_wide.shape[0]
    hidden = w1_wide.shape[1] // n_models
    outp_dim = w2_t.shape[1]
    batch = x.shape[0]
    n_blocks = n_models // mb
    out_dtype = x.dtype

    # Lane/sublane layout assumptions (enforced for the demo shapes).
    assert hidden % 128 == 0, "hidden must be a multiple of 128 (lane-dense)"
    assert (mb * outp_dim) % 128 == 0, "mb*outp_dim must be a multiple of 128"
    assert batch % 8 == 0 and inp_dim % 8 == 0
    assert outp_dim % 8 == 0

    xc = x.astype(compute_dtype)

    kernel = functools.partial(_ensemble_kernel,
                               mb=mb, hidden=hidden, outp_dim=outp_dim)

    out = pl.pallas_call(
        kernel,
        out_shape=jax.ShapeDtypeStruct((n_blocks, batch, mb * outp_dim),
                                       out_dtype),
        grid_spec=pltpu.PrefetchScalarGridSpec(
            num_scalar_prefetch=0,
            grid=(n_blocks,),
            in_specs=[
                pl.BlockSpec((batch, inp_dim), lambda m: (0, 0)),
                pl.BlockSpec((inp_dim, mb * hidden), lambda m: (0, m)),
                pl.BlockSpec((1, mb * hidden), lambda m: (0, m)),
                pl.BlockSpec((mb, outp_dim, hidden), lambda m: (m, 0, 0)),
                pl.BlockSpec((1, mb * outp_dim), lambda m: (0, m)),
            ],
            out_specs=pl.BlockSpec((1, batch, mb * outp_dim),
                                   lambda m: (m, 0, 0)),
            scratch_shapes=[pltpu.VMEM((batch, mb * outp_dim), jnp.float32)],
        ),
        compiler_params=pltpu.CompilerParams(
            dimension_semantics=("parallel",),
            vmem_limit_bytes=32 * 1024 * 1024),
    )(xc, w1_wide, b1_wide, w2_t, b2_wide)

    # (n_blocks, B, MB*OUT) -> (n_models, B, OUT)
    out = out.reshape(n_blocks, batch, mb, outp_dim)
    out = jnp.transpose(out, (0, 2, 1, 3)).reshape(n_models, batch, outp_dim)
    return out


def _reference(x, w1, b1, w2, b2, compute_dtype=jnp.bfloat16):
    # Pure-JAX reference mirroring the kernel's bf16 operand / f32 accumulate.
    xc = x.astype(compute_dtype).astype(jnp.float32)
    w1c = w1.astype(compute_dtype).astype(jnp.float32)
    w2c = w2.astype(compute_dtype).astype(jnp.float32)
    h = jnp.einsum("bi,mih->mbh", xc, w1c) + b1[:, None, :]
    h = jnp.maximum(h, 0.0)
    h = h.astype(compute_dtype).astype(jnp.float32)
    y = jnp.einsum("mbh,mho->mbo", h, w2c) + b2[:, None, :]
    return y.astype(x.dtype)


if __name__ == "__main__":
    # Small shapes consistent with the module.  hidden is 128-aligned and
    # mb*outp_dim is a multiple of 128 so the output slab is lane-dense.
    n_models = 16
    batch = 8
    inp_dim = 32
    hidden = 128
    outp_dim = 16

    key = jax.random.PRNGKey(0)
    kx, k1, k2, k3, k4 = jax.random.split(key, 5)

    x = jax.random.normal(kx, (batch, inp_dim), dtype=jnp.float32)
    # Deterministic per-model parameters (synthetic; no checkpoint load).
    w1 = jax.random.normal(k1, (n_models, inp_dim, hidden), jnp.float32) * 0.1
    b1 = jax.random.normal(k2, (n_models, hidden), jnp.float32) * 0.1
    w2 = jax.random.normal(k3, (n_models, hidden, outp_dim), jnp.float32) * 0.1
    b2 = jax.random.normal(k4, (n_models, outp_dim), jnp.float32) * 0.1

    # Generation-aware grid: grid=(1,) on single-TC v5e/v6e, even grid on v7x.
    mb = _default_model_block(n_models)

    # Weight relayout / cast done ONCE (hoisted out of the forward path).
    prepared = prepare_ensemble_params(w1, b1, w2, b2, mb=mb)
    prepared = jax.block_until_ready(prepared)

    out = ensemble_forward(x, prepared, n_models=n_models, mb=mb)
    out = jax.block_until_ready(out)

    ref = _reference(x, w1, b1, w2, b2)
    assert out.shape == (n_models, batch, outp_dim), out.shape
    assert jnp.allclose(out, ref, atol=1e-3, rtol=1e-3), "mismatch vs reference"

    print("KERNEL_OK")
</pallas_src>

<mosaic_0001>
module attributes {stable_mosaic.version = 11 : i64} {
  func.func @_ensemble_kernel(%arg0: i32, %arg1: memref<8x32xbf16, #tpu.memory_space<vmem>>, %arg2: memref<32x2048xbf16, #tpu.memory_space<vmem>>, %arg3: memref<1x2048xf32, #tpu.memory_space<vmem>>, %arg4: memref<16x16x128xbf16, #tpu.memory_space<vmem>>, %arg5: memref<1x256xf32, #tpu.memory_space<vmem>>, %arg6: memref<1x8x256xf32, #tpu.memory_space<vmem>>, %arg7: memref<8x256xf32, #tpu.memory_space<vmem>>) attributes {dimension_semantics = [#tpu.dimension_semantics<parallel>], iteration_bounds = array<i64: 1>, scalar_prefetch = 0 : i64, scratch_operands = 1 : i64, tpu.core_type = #tpu.core_type<tc>, window_params = [{pipeline_mode = #tpu.pipeline_mode<synchronous>, transform_indices = @transform_0, window_bounds = array<i64: 8, 32>}, {transform_indices = @transform_1, window_bounds = array<i64: 32, 2048>}, {transform_indices = @transform_2, window_bounds = array<i64: 1, 2048>}, {transform_indices = @transform_3, window_bounds = array<i64: 16, 16, 128>}, {transform_indices = @transform_4, window_bounds = array<i64: 1, 256>}, {transform_indices = @transform_5, window_bounds = array<i64: 1, 8, 256>}]} {
    %c0 = arith.constant 0 : index
    %c0_0 = arith.constant 0 : index
    %0 = vector.load %arg1[%c0, %c0_0] : memref<8x32xbf16, #tpu.memory_space<vmem>>, vector<8x32xbf16>
    %c0_1 = arith.constant 0 : index
    %c0_2 = arith.constant 0 : index
    %1 = vector.load %arg2[%c0_1, %c0_2] : memref<32x2048xbf16, #tpu.memory_space<vmem>>, vector<32x2048xbf16>
    %cst = arith.constant dense<0.000000e+00> : vector<8x2048xf32>
    %2 = tpu.matmul %0, %1, %cst {dimension_numbers = #tpu.dot_dimension_numbers<[1], [0], [0], [1], [0, 0, 1, 1], [], []>} : vector<8x32xbf16>, vector<32x2048xbf16>, vector<8x2048xf32> -> vector<8x2048xf32>
    %c0_3 = arith.constant 0 : index
    %c0_4 = arith.constant 0 : index
    %3 = vector.load %arg3[%c0_3, %c0_4] : memref<1x2048xf32, #tpu.memory_space<vmem>>, vector<1x2048xf32>
    %4 = vector.broadcast %3 : vector<1x2048xf32> to vector<8x2048xf32>
    %5 = arith.addf %2, %4 : vector<8x2048xf32>
    %cst_5 = arith.constant 0.000000e+00 : f32
    %6 = vector.broadcast %cst_5 : f32 to vector<8x2048xf32>
    %7 = arith.maximumf %5, %6 : vector<8x2048xf32>
    %8 = arith.truncf %7 : vector<8x2048xf32> to vector<8x2048xbf16>
    %9 = vector.extract_strided_slice %8 {offsets = [0, 0], sizes = [8, 128], strides = [1, 1]} : vector<8x2048xbf16> to vector<8x128xbf16>
    %c0_6 = arith.constant 0 : index
    %c0_7 = arith.constant 0 : index
    %c0_8 = arith.constant 0 : index
    %10 = vector.load %arg4[%c0_6, %c0_7, %c0_8] : memref<16x16x128xbf16, #tpu.memory_space<vmem>>, vector<1x16x128xbf16>
    %11 = vector.shape_cast %10 : vector<1x16x128xbf16> to vector<16x128xbf16>
    %cst_9 = arith.constant dense<0.000000e+00> : vector<8x16xf32>
    %12 = tpu.matmul %9, %11, %cst_9 {dimension_numbers = #tpu.dot_dimension_numbers<[1], [1], [0], [0], [0, 0, 1, 0], [], []>} : vector<8x128xbf16>, vector<16x128xbf16>, vector<8x16xf32> -> vector<8x16xf32>
    %c0_10 = arith.constant 0 : index
    %c0_11 = arith.constant 0 : index
    %13 = vector.load %arg7[%c0_10, %c0_11] : memref<8x256xf32, #tpu.memory_space<vmem>>, vector<8x16xf32>
    tpu.vector_store %arg7[%c0_10, %c0_11], %12 {strides = array<i32>} : memref<8x256xf32, #tpu.memory_space<vmem>>, vector<8x16xf32>,
    %14 = vector.extract_strided_slice %8 {offsets = [0, 128], sizes = [8, 128], strides = [1, 1]} : vector<8x2048xbf16> to vector<8x128xbf16>
    %c1 = arith.constant 1 : index
    %c0_12 = arith.constant 0 : index
    %c0_13 = arith.constant 0 : index
    %15 = vector.load %arg4[%c1, %c0_12, %c0_13] : memref<16x16x128xbf16, #tpu.memory_space<vmem>>, vector<1x16x128xbf16>
    %16 = vector.shape_cast %15 : vector<1x16x128xbf16> to vector<16x128xbf16>
    %cst_14 = arith.constant dense<0.000000e+00> : vector<8x16xf32>
    %17 = tpu.matmul %14, %16, %cst_14 {dimension_numbers = #tpu.dot_dimension_numbers<[1], [1], [0], [0], [0, 0, 1, 0], [], []>} : vector<8x128xbf16>, vector<16x128xbf16>, vector<8x16xf32> -> vector<8x16xf32>
    %c0_15 = arith.constant 0 : index
    %c16 = arith.constant 16 : index
    %18 = vector.load %arg7[%c0_15, %c16] : memref<8x256xf32, #tpu.memory_space<vmem>>, vector<8x16xf32>
    tpu.vector_store %arg7[%c0_15, %c16], %17 {strides = array<i32>} : memref<8x256xf32, #tpu.memory_space<vmem>>, vector<8x16xf32>,
    %19 = vector.extract_strided_slice %8 {offsets = [0, 256], sizes = [8, 128], strides = [1, 1]} : vector<8x2048xbf16> to vector<8x128xbf16>
    %c2 = arith.constant 2 : index
    %c0_16 = arith.constant 0 : index
    %c0_17 = arith.constant 0 : index
    %20 = vector.load %arg4[%c2, %c0_16, %c0_17] : memref<16x16x128xbf16, #tpu.memory_space<vmem>>, vector<1x16x128xbf16>
    %21 = vector.shape_cast %20 : vector<1x16x128xbf16> to vector<16x128xbf16>
    %cst_18 = arith.constant dense<0.000000e+00> : vector<8x16xf32>
    %22 = tpu.matmul %19, %21, %cst_18 {dimension_numbers = #tpu.dot_dimension_numbers<[1], [1], [0], [0], [0, 0, 1, 0], [], []>} : vector<8x128xbf16>, vector<16x128xbf16>, vector<8x16xf32> -> vector<8x16xf32>
    %c0_19 = arith.constant 0 : index
    %c32 = arith.constant 32 : index
    %23 = vector.load %arg7[%c0_19, %c32] : memref<8x256xf32, #tpu.memory_space<vmem>>, vector<8x16xf32>
    tpu.vector_store %arg7[%c0_19, %c32], %22 {strides = array<i32>} : memref<8x256xf32, #tpu.memory_space<vmem>>, vector<8x16xf32>,
    %24 = vector.extract_strided_slice %8 {offsets = [0, 384], sizes = [8, 128], strides = [1, 1]} : vector<8x2048xbf16> to vector<8x128xbf16>
    %c3 = arith.constant 3 : index
    %c0_20 = arith.constant 0 : index
    %c0_21 = arith.constant 0 : index
    %25 = vector.load %arg4[%c3, %c0_20, %c0_21] : memref<16x16x128xbf16, #tpu.memory_space<vmem>>, vector<1x16x128xbf16>
    %26 = vector.shape_cast %25 : vector<1x16x128xbf16> to vector<16x128xbf16>
    %cst_22 = arith.constant dense<0.000000e+00> : vector<8x16xf32>
    %27 = tpu.matmul %24, %26, %cst_22 {dimension_numbers = #tpu.dot_dimension_numbers<[1], [1], [0], [0], [0, 0, 1, 0], [], []>} : vector<8x128xbf16>, vector<16x128xbf16>, vector<8x16xf32> -> vector<8x16xf32>
    %c0_23 = arith.constant 0 : index
    %c48 = arith.constant 48 : index
    %28 = vector.load %arg7[%c0_23, %c48] : memref<8x256xf32, #tpu.memory_space<vmem>>, vector<8x16xf32>
    tpu.vector_store %arg7[%c0_23, %c48], %27 {strides = array<i32>} : memref<8x256xf32, #tpu.memory_space<vmem>>, vector<8x16xf32>,
    %29 = vector.extract_strided_slice %8 {offsets = [0, 512], sizes = [8, 128], strides = [1, 1]} : vector<8x2048xbf16> to vector<8x128xbf16>
    %c4 = arith.constant 4 : index
    %c0_24 = arith.constant 0 : index
    %c0_25 = arith.constant 0 : index
    %30 = vector.load %arg4[%c4, %c0_24, %c0_25] : memref<16x16x128xbf16, #tpu.memory_space<vmem>>, vector<1x16x128xbf16>
    %31 = vector.shape_cast %30 : vector<1x16x128xbf16> to vector<16x128xbf16>
    %cst_26 = arith.constant dense<0.000000e+00> : vector<8x16xf32>
    %32 = tpu.matmul %29, %31, %cst_26 {dimension_numbers = #tpu.dot_dimension_numbers<[1], [1], [0], [0], [0, 0, 1, 0], [], []>} : vector<8x128xbf16>, vector<16x128xbf16>, vector<8x16xf32> -> vector<8x16xf32>
    %c0_27 = arith.constant 0 : index
    %c64 = arith.constant 64 : index
    %33 = vector.load %arg7[%c0_27, %c64] : memref<8x256xf32, #tpu.memory_space<vmem>>, vector<8x16xf32>
    tpu.vector_store %arg7[%c0_27, %c64], %32 {strides = array<i32>} : memref<8x256xf32, #tpu.memory_space<vmem>>, vector<8x16xf32>,
    %34 = vector.extract_strided_slice %8 {offsets = [0, 640], sizes = [8, 128], strides = [1, 1]} : vector<8x2048xbf16> to vector<8x128xbf16>
    %c5 = arith.constant 5 : index
    %c0_28 = arith.constant 0 : index
    %c0_29 = arith.constant 0 : index
    %35 = vector.load %arg4[%c5, %c0_28, %c0_29] : memref<16x16x128xbf16, #tpu.memory_space<vmem>>, vector<1x16x128xbf16>
    %36 = vector.shape_cast %35 : vector<1x16x128xbf16> to vector<16x128xbf16>
    %cst_30 = arith.constant dense<0.000000e+00> : vector<8x16xf32>
    %37 = tpu.matmul %34, %36, %cst_30 {dimension_numbers = #tpu.dot_dimension_numbers<[1], [1], [0], [0], [0, 0, 1, 0], [], []>} : vector<8x128xbf16>, vector<16x128xbf16>, vector<8x16xf32> -> vector<8x16xf32>
    %c0_31 = arith.constant 0 : index
    %c80 = arith.constant 80 : index
    %38 = vector.load %arg7[%c0_31, %c80] : memref<8x256xf32, #tpu.memory_space<vmem>>, vector<8x16xf32>
    tpu.vector_store %arg7[%c0_31, %c80], %37 {strides = array<i32>} : memref<8x256xf32, #tpu.memory_space<vmem>>, vector<8x16xf32>,
    %39 = vector.extract_strided_slice %8 {offsets = [0, 768], sizes = [8, 128], strides = [1, 1]} : vector<8x2048xbf16> to vector<8x128xbf16>
    %c6 = arith.constant 6 : index
    %c0_32 = arith.constant 0 : index
    %c0_33 = arith.constant 0 : index
    %40 = vector.load %arg4[%c6, %c0_32, %c0_33] : memref<16x16x128xbf16, #tpu.memory_space<vmem>>, vector<1x16x128xbf16>
    %41 = vector.shape_cast %40 : vector<1x16x128xbf16> to vector<16x128xbf16>
    %cst_34 = arith.constant dense<0.000000e+00> : vector<8x16xf32>
    %42 = tpu.matmul %39, %41, %cst_34 {dimension_numbers = #tpu.dot_dimension_numbers<[1], [1], [0], [0], [0, 0, 1, 0], [], []>} : vector<8x128xbf16>, vector<16x128xbf16>, vector<8x16xf32> -> vector<8x16xf32>
    %c0_35 = arith.constant 0 : index
    %c96 = arith.constant 96 : index
    %43 = vector.load %arg7[%c0_35, %c96] : memref<8x256xf32, #tpu.memory_space<vmem>>, vector<8x16xf32>
    tpu.vector_store %arg7[%c0_35, %c96], %42 {strides = array<i32>} : memref<8x256xf32, #tpu.memory_space<vmem>>, vector<8x16xf32>,
    %44 = vector.extract_strided_slice %8 {offsets = [0, 896], sizes = [8, 128], strides = [1, 1]} : vector<8x2048xbf16> to vector<8x128xbf16>
    %c7 = arith.constant 7 : index
    %c0_36 = arith.constant 0 : index
    %c0_37 = arith.constant 0 : index
    %45 = vector.load %arg4[%c7, %c0_36, %c0_37] : memref<16x16x128xbf16, #tpu.memory_space<vmem>>, vector<1x16x128xbf16>
    %46 = vector.shape_cast %45 : vector<1x16x128xbf16> to vector<16x128xbf16>
    %cst_38 = arith.constant dense<0.000000e+00> : vector<8x16xf32>
    %47 = tpu.matmul %44, %46, %cst_38 {dimension_numbers = #tpu.dot_dimension_numbers<[1], [1], [0], [0], [0, 0, 1, 0], [], []>} : vector<8x128xbf16>, vector<16x128xbf16>, vector<8x16xf32> -> vector<8x16xf32>
    %c0_39 = arith.constant 0 : index
    %c112 = arith.constant 112 : index
    %48 = vector.load %arg7[%c0_39, %c112] : memref<8x256xf32, #tpu.memory_space<vmem>>, vector<8x16xf32>
    tpu.vector_store %arg7[%c0_39, %c112], %47 {strides = array<i32>} : memref<8x256xf32, #tpu.memory_space<vmem>>, vector<8x16xf32>,
    %49 = vector.extract_strided_slice %8 {offsets = [0, 1024], sizes = [8, 128], strides = [1, 1]} : vector<8x2048xbf16> to vector<8x128xbf16>
    %c8 = arith.constant 8 : index
    %c0_40 = arith.constant 0 : index
    %c0_41 = arith.constant 0 : index
    %50 = vector.load %arg4[%c8, %c0_40, %c0_41] : memref<16x16x128xbf16, #tpu.memory_space<vmem>>, vector<1x16x128xbf16>
    %51 = vector.shape_cast %50 : vector<1x16x128xbf16> to vector<16x128xbf16>
    %cst_42 = arith.constant dense<0.000000e+00> : vector<8x16xf32>
    %52 = tpu.matmul %49, %51, %cst_42 {dimension_numbers = #tpu.dot_dimension_numbers<[1], [1], [0], [0], [0, 0, 1, 0], [], []>} : vector<8x128xbf16>, vector<16x128xbf16>, vector<8x16xf32> -> vector<8x16xf32>
    %c0_43 = arith.constant 0 : index
    %c128 = arith.constant 128 : index
    %53 = vector.load %arg7[%c0_43, %c128] : memref<8x256xf32, #tpu.memory_space<vmem>>, vector<8x16xf32>
    tpu.vector_store %arg7[%c0_43, %c128], %52 {strides = array<i32>} : memref<8x256xf32, #tpu.memory_space<vmem>>, vector<8x16xf32>,
    %54 = vector.extract_strided_slice %8 {offsets = [0, 1152], sizes = [8, 128], strides = [1, 1]} : vector<8x2048xbf16> to vector<8x128xbf16>
    %c9 = arith.constant 9 : index
    %c0_44 = arith.constant 0 : index
    %c0_45 = arith.constant 0 : index
    %55 = vector.load %arg4[%c9, %c0_44, %c0_45] : memref<16x16x128xbf16, #tpu.memory_space<vmem>>, vector<1x16x128xbf16>
    %56 = vector.shape_cast %55 : vector<1x16x128xbf16> to vector<16x128xbf16>
    %cst_46 = arith.constant dense<0.000000e+00> : vector<8x16xf32>
    %57 = tpu.matmul %54, %56, %cst_46 {dimension_numbers = #tpu.dot_dimension_numbers<[1], [1], [0], [0], [0, 0, 1, 0], [], []>} : vector<8x128xbf16>, vector<16x128xbf16>, vector<8x16xf32> -> vector<8x16xf32>
    %c0_47 = arith.constant 0 : index
    %c144 = arith.constant 144 : index
    %58 = vector.load %arg7[%c0_47, %c144] : memref<8x256xf32, #tpu.memory_space<vmem>>, vector<8x16xf32>
    tpu.vector_store %arg7[%c0_47, %c144], %57 {strides = array<i32>} : memref<8x256xf32, #tpu.memory_space<vmem>>, vector<8x16xf32>,
    %59 = vector.extract_strided_slice %8 {offsets = [0, 1280], sizes = [8, 128], strides = [1, 1]} : vector<8x2048xbf16> to vector<8x128xbf16>
    %c10 = arith.constant 10 : index
    %c0_48 = arith.constant 0 : index
    %c0_49 = arith.constant 0 : index
    %60 = vector.load %arg4[%c10, %c0_48, %c0_49] : memref<16x16x128xbf16, #tpu.memory_space<vmem>>, vector<1x16x128xbf16>
    %61 = vector.shape_cast %60 : vector<1x16x128xbf16> to vector<16x128xbf16>
    %cst_50 = arith.constant dense<0.000000e+00> : vector<8x16xf32>
    %62 = tpu.matmul %59, %61, %cst_50 {dimension_numbers = #tpu.dot_dimension_numbers<[1], [1], [0], [0], [0, 0, 1, 0], [], []>} : vector<8x128xbf16>, vector<16x128xbf16>, vector<8x16xf32> -> vector<8x16xf32>
    %c0_51 = arith.constant 0 : index
    %c160 = arith.constant 160 : index
    %63 = vector.load %arg7[%c0_51, %c160] : memref<8x256xf32, #tpu.memory_space<vmem>>, vector<8x16xf32>
    tpu.vector_store %arg7[%c0_51, %c160], %62 {strides = array<i32>} : memref<8x256xf32, #tpu.memory_space<vmem>>, vector<8x16xf32>,
    %64 = vector.extract_strided_slice %8 {offsets = [0, 1408], sizes = [8, 128], strides = [1, 1]} : vector<8x2048xbf16> to vector<8x128xbf16>
    %c11 = arith.constant 11 : index
    %c0_52 = arith.constant 0 : index
    %c0_53 = arith.constant 0 : index
    %65 = vector.load %arg4[%c11, %c0_52, %c0_53] : memref<16x16x128xbf16, #tpu.memory_space<vmem>>, vector<1x16x128xbf16>
    %66 = vector.shape_cast %65 : vector<1x16x128xbf16> to vector<16x128xbf16>
    %cst_54 = arith.constant dense<0.000000e+00> : vector<8x16xf32>
    %67 = tpu.matmul %64, %66, %cst_54 {dimension_numbers = #tpu.dot_dimension_numbers<[1], [1], [0], [0], [0, 0, 1, 0], [], []>} : vector<8x128xbf16>, vector<16x128xbf16>, vector<8x16xf32> -> vector<8x16xf32>
    %c0_55 = arith.constant 0 : index
    %c176 = arith.constant 176 : index
    %68 = vector.load %arg7[%c0_55, %c176] : memref<8x256xf32, #tpu.memory_space<vmem>>, vector<8x16xf32>
    tpu.vector_store %arg7[%c0_55, %c176], %67 {strides = array<i32>} : memref<8x256xf32, #tpu.memory_space<vmem>>, vector<8x16xf32>,
    %69 = vector.extract_strided_slice %8 {offsets = [0, 1536], sizes = [8, 128], strides = [1, 1]} : vector<8x2048xbf16> to vector<8x128xbf16>
    %c12 = arith.constant 12 : index
    %c0_56 = arith.constant 0 : index
    %c0_57 = arith.constant 0 : index
    %70 = vector.load %arg4[%c12, %c0_56, %c0_57] : memref<16x16x128xbf16, #tpu.memory_space<vmem>>, vector<1x16x128xbf16>
    %71 = vector.shape_cast %70 : vector<1x16x128xbf16> to vector<16x128xbf16>
    %cst_58 = arith.constant dense<0.000000e+00> : vector<8x16xf32>
    %72 = tpu.matmul %69, %71, %cst_58 {dimension_numbers = #tpu.dot_dimension_numbers<[1], [1], [0], [0], [0, 0, 1, 0], [], []>} : vector<8x128xbf16>, vector<16x128xbf16>, vector<8x16xf32> -> vector<8x16xf32>
    %c0_59 = arith.constant 0 : index
    %c192 = arith.constant 192 : index
    %73 = vector.load %arg7[%c0_59, %c192] : memref<8x256xf32, #tpu.memory_space<vmem>>, vector<8x16xf32>
    tpu.vector_store %arg7[%c0_59, %c192], %72 {strides = array<i32>} : memref<8x256xf32, #tpu.memory_space<vmem>>, vector<8x16xf32>,
    %74 = vector.extract_strided_slice %8 {offsets = [0, 1664], sizes = [8, 128], strides = [1, 1]} : vector<8x2048xbf16> to vector<8x128xbf16>
    %c13 = arith.constant 13 : index
    %c0_60 = arith.constant 0 : index
    %c0_61 = arith.constant 0 : index
    %75 = vector.load %arg4[%c13, %c0_60, %c0_61] : memref<16x16x128xbf16, #tpu.memory_space<vmem>>, vector<1x16x128xbf16>
    %76 = vector.shape_cast %75 : vector<1x16x128xbf16> to vector<16x128xbf16>
    %cst_62 = arith.constant dense<0.000000e+00> : vector<8x16xf32>
    %77 = tpu.matmul %74, %76, %cst_62 {dimension_numbers = #tpu.dot_dimension_numbers<[1], [1], [0], [0], [0, 0, 1, 0], [], []>} : vector<8x128xbf16>, vector<16x128xbf16>, vector<8x16xf32> -> vector<8x16xf32>
    %c0_63 = arith.constant 0 : index
    %c208 = arith.constant 208 : index
    %78 = vector.load %arg7[%c0_63, %c208] : memref<8x256xf32, #tpu.memory_space<vmem>>, vector<8x16xf32>
    tpu.vector_store %arg7[%c0_63, %c208], %77 {strides = array<i32>} : memref<8x256xf32, #tpu.memory_space<vmem>>, vector<8x16xf32>,
    %79 = vector.extract_strided_slice %8 {offsets = [0, 1792], sizes = [8, 128], strides = [1, 1]} : vector<8x2048xbf16> to vector<8x128xbf16>
    %c14 = arith.constant 14 : index
    %c0_64 = arith.constant 0 : index
    %c0_65 = arith.constant 0 : index
    %80 = vector.load %arg4[%c14, %c0_64, %c0_65] : memref<16x16x128xbf16, #tpu.memory_space<vmem>>, vector<1x16x128xbf16>
    %81 = vector.shape_cast %80 : vector<1x16x128xbf16> to vector<16x128xbf16>
    %cst_66 = arith.constant dense<0.000000e+00> : vector<8x16xf32>
    %82 = tpu.matmul %79, %81, %cst_66 {dimension_numbers = #tpu.dot_dimension_numbers<[1], [1], [0], [0], [0, 0, 1, 0], [], []>} : vector<8x128xbf16>, vector<16x128xbf16>, vector<8x16xf32> -> vector<8x16xf32>
    %c0_67 = arith.constant 0 : index
    %c224 = arith.constant 224 : index
    %83 = vector.load %arg7[%c0_67, %c224] : memref<8x256xf32, #tpu.memory_space<vmem>>, vector<8x16xf32>
    tpu.vector_store %arg7[%c0_67, %c224], %82 {strides = array<i32>} : memref<8x256xf32, #tpu.memory_space<vmem>>, vector<8x16xf32>,
    %84 = vector.extract_strided_slice %8 {offsets = [0, 1920], sizes = [8, 128], strides = [1, 1]} : vector<8x2048xbf16> to vector<8x128xbf16>
    %c15 = arith.constant 15 : index
    %c0_68 = arith.constant 0 : index
    %c0_69 = arith.constant 0 : index
    %85 = vector.load %arg4[%c15, %c0_68, %c0_69] : memref<16x16x128xbf16, #tpu.memory_space<vmem>>, vector<1x16x128xbf16>
    %86 = vector.shape_cast %85 : vector<1x16x128xbf16> to vector<16x128xbf16>
    %cst_70 = arith.constant dense<0.000000e+00> : vector<8x16xf32>
    %87 = tpu.matmul %84, %86, %cst_70 {dimension_numbers = #tpu.dot_dimension_numbers<[1], [1], [0], [0], [0, 0, 1, 0], [], []>} : vector<8x128xbf16>, vector<16x128xbf16>, vector<8x16xf32> -> vector<8x16xf32>
    %c0_71 = arith.constant 0 : index
    %c240 = arith.constant 240 : index
    %88 = vector.load %arg7[%c0_71, %c240] : memref<8x256xf32, #tpu.memory_space<vmem>>, vector<8x16xf32>
    tpu.vector_store %arg7[%c0_71, %c240], %87 {strides = array<i32>} : memref<8x256xf32, #tpu.memory_space<vmem>>, vector<8x16xf32>,
    %c0_72 = arith.constant 0 : index
    %c0_73 = arith.constant 0 : index
    %89 = vector.load %arg7[%c0_72, %c0_73] : memref<8x256xf32, #tpu.memory_space<vmem>>, vector<8x256xf32>
    %c0_74 = arith.constant 0 : index
    %c0_75 = arith.constant 0 : index
    %90 = vector.load %arg5[%c0_74, %c0_75] : memref<1x256xf32, #tpu.memory_space<vmem>>, vector<1x256xf32>
    %91 = vector.broadcast %90 : vector<1x256xf32> to vector<8x256xf32>
    %92 = arith.addf %89, %91 : vector<8x256xf32>
    %c0_76 = arith.constant 0 : index
    %c0_77 = arith.constant 0 : index
    %c0_78 = arith.constant 0 : index
    %93 = vector.load %arg6[%c0_76, %c0_77, %c0_78] : memref<1x8x256xf32, #tpu.memory_space<vmem>>, vector<1x8x256xf32>
    %94 = vector.shape_cast %93 : vector<1x8x256xf32> to vector<8x256xf32>
    %95 = vector.shape_cast %92 : vector<8x256xf32> to vector<1x8x256xf32>
    tpu.vector_store %arg6[%c0_76, %c0_77, %c0_78], %95 {strides = array<i32>} : memref<1x8x256xf32, #tpu.memory_space<vmem>>, vector<1x8x256xf32>,
    return
  }
  func.func @transform_0(%arg0: i32) -> (i32, i32) {
    %c0_i32 = arith.constant 0 : i32
    %c0_i32_0 = arith.constant 0 : i32
    %c0_i32_1 = arith.constant 0 : i32
    return %c0_i32, %c0_i32_0 : i32, i32
  }
  func.func @transform_1(%arg0: i32) -> (i32, i32) {
    %c0_i32 = arith.constant 0 : i32
    %c0_i32_0 = arith.constant 0 : i32
    return %c0_i32, %arg0 : i32, i32
  }
  func.func @transform_2(%arg0: i32) -> (i32, i32) {
    %c0_i32 = arith.constant 0 : i32
    %c0_i32_0 = arith.constant 0 : i32
    return %c0_i32, %arg0 : i32, i32
  }
  func.func @transform_3(%arg0: i32) -> (i32, i32, i32) {
    %c0_i32 = arith.constant 0 : i32
    %c0_i32_0 = arith.constant 0 : i32
    %c0_i32_1 = arith.constant 0 : i32
    return %arg0, %c0_i32, %c0_i32_0 : i32, i32, i32
  }
  func.func @transform_4(%arg0: i32) -> (i32, i32) {
    %c0_i32 = arith.constant 0 : i32
    %c0_i32_0 = arith.constant 0 : i32
    return %c0_i32, %arg0 : i32, i32
  }
  func.func @transform_5(%arg0: i32) -> (i32, i32, i32) {
    %c0_i32 = arith.constant 0 : i32
    %c0_i32_0 = arith.constant 0 : i32
    %c0_i32_1 = arith.constant 0 : i32
    return %arg0, %c0_i32, %c0_i32_0 : i32, i32, i32
  }
}

</mosaic_0001>

<llo_original>
// kernel: tpu_custom_call.1
$region0: #{tpu_custom_call.1}
  #allocation0 [shape = 'u32[]', space=smem, size = 0x4, offset = 0x4, fixed_abs, tag = 'smem constant byte address 0x4 - core index']
  #allocation1 [shape = 'u32[144,128]{1,0:T(1,128)}', space=vmem, size = 0x12000, scoped, tag = 'internal scratch']
  #allocation2 [shape = 'f32[8,256]{1,0:T(8,128)}', space=vmem, size = 0x2000, scoped, tag = 'scratch operand']
  %s0 = inlined_call_operand.hbm [shape: bf16[8,32], index: 0, kind: input, shape index: {}]
  %s1 = inlined_call_operand.hbm [shape: bf16[32,2048], index: 1, kind: input, shape index: {}]
  %s2 = inlined_call_operand.hbm [shape: f32[1,2048], index: 2, kind: input, shape index: {}]
  %s3 = inlined_call_operand.hbm [shape: bf16[16,16,128], index: 3, kind: input, shape index: {}]
  %s4 = inlined_call_operand.vmem [shape: f32[1,256], index: 4, kind: input, shape index: {}]
  %s5 = inlined_call_operand.hbm [shape: f32[1,8,256], index: 5, kind: output, shape index: {}]
  %s6 = sld [smem:[#allocation0]]
  $region46: #{tpu_custom_call.1} parent=0
    _
  %s8 = ssub.s32 1, %s6
  %s9 = scalar_select 0, %s8, %s6
  $region1: #{tpu_custom_call.1} parent=0
    #allocation3 [shape = 'u8[2048]{0}', space=vmem, size = 0x800, scoped, tag = 'input window, operand 0, single buffered']
    #allocation4 [shape = 's32[1]{0}', space=sflag, size = 0x4, scoped, tag = 'scoped memory for tpu_custom_call.1']
    #allocation5 [shape = 's32[1]{0}', space=sflag, size = 0x4, scoped, tag = 'scoped memory for tpu_custom_call.1']
    #allocation6 [shape = 'u8[131072]{0}', space=vmem, size = 0x20000, scoped, tag = 'input window, operand 1, single buffered']
    #allocation7 [shape = 's32[1]{0}', space=sflag, size = 0x4, scoped, tag = 'scoped memory for tpu_custom_call.1']
    #allocation8 [shape = 'u8[8192]{0}', space=vmem, size = 0x2000, scoped, tag = 'input window, operand 2, single buffered']
    #allocation9 [shape = 'u8[65536]{0}', space=vmem, size = 0x10000, scoped, tag = 'input window, operand 3, single buffered']
    #allocation10 [shape = 's32[1]{0}', space=sflag, size = 0x4, scoped, tag = 'scoped memory for tpu_custom_call.1']
    #allocation11 [shape = 'u8[8192]{0}', space=vmem, size = 0x2000, scoped, tag = 'output window, operand 0, single buffered']
    %10 = vsyncpa [#allocation4], 0
    %11 = vsyncpa [#allocation7], 0
    %12 = vsyncpa [#allocation10], 0
    %13 = vsyncpa [#allocation5], 0
    // Predicated region
    $region2: #{tpu_custom_call.1} parent=1 // pred_check
      _
    $region3: #{tpu_custom_call.1} parent=1 // pred_check_branch
      %15 = sbr.rel (0) target = $region5
    $region4: #{tpu_custom_call.1} parent=1 // pred_region
      %s17 = ssub.s32 64, 64
      %18 = vsyncadd [#allocation4], %s17
      %s20 = sshll.u32 [#allocation3], 4
      %s21 = int_to_ptr.vmem [resolvable:$true] %s20
      %23 = dma.hbm_to_vmem [thread:$0]  %s0, 64, %s21, [#allocation4]
    $region5: #{tpu_custom_call.1} parent=1 // pred_fallthru
      _
    // Predicated region
    $region6: #{tpu_custom_call.1} parent=1 // pred_check
      _
    $region7: #{tpu_custom_call.1} parent=1 // pred_check_branch
      %25 = sbr.rel (0) target = $region9
    $region8: #{tpu_custom_call.1} parent=1 // pred_region
      %s27 = ssub.s32 4096, 4096
      %28 = vsyncadd [#allocation7], %s27
      %s29 = sshll.u32 [#allocation6], 4
      %s30 = int_to_ptr.vmem [resolvable:$true] %s29
      %35 = dma.hbm_to_vmem [thread:$0]  %s1, 4096, %s30, [#allocation7], 1024, 1024, 64
    $region9: #{tpu_custom_call.1} parent=1 // pred_fallthru
      _
    // Predicated region
    $region10: #{tpu_custom_call.1} parent=1 // pred_check
      _
    $region11: #{tpu_custom_call.1} parent=1 // pred_check_branch
      %37 = sbr.rel (0) target = $region13
    $region12: #{tpu_custom_call.1} parent=1 // pred_region
      %s39 = ssub.s32 256, 256
      %40 = vsyncadd [#allocation7], %s39
      %s42 = sshll.u32 [#allocation8], 4
      %s43 = int_to_ptr.vmem [resolvable:$true] %s42
      %45 = dma.hbm_to_vmem [thread:$0]  %s2, 256, %s43, [#allocation7]
    $region13: #{tpu_custom_call.1} parent=1 // pred_fallthru
      _
    // Predicated region
    $region14: #{tpu_custom_call.1} parent=1 // pred_check
      _
    $region15: #{tpu_custom_call.1} parent=1 // pred_check_branch
      %47 = sbr.rel (0) target = $region17
    $region16: #{tpu_custom_call.1} parent=1 // pred_region
      %s49 = ssub.s32 2048, 2048
      %50 = vsyncadd [#allocation10], %s49
      %s51 = sshll.u32 [#allocation9], 4
      %s52 = int_to_ptr.vmem [resolvable:$true] %s51
      %57 = dma.hbm_to_vmem [thread:$0]  %s3, 2048, %s52, [#allocation10], 64, 64, 4
    $region17: #{tpu_custom_call.1} parent=1 // pred_fallthru
      _
    // Predicated region
    $region18: #{tpu_custom_call.1} parent=1 // pred_check
      _
    $region19: #{tpu_custom_call.1} parent=1 // pred_check_branch
      %59 = sbr.rel (0) target = $region21
    $region20: #{tpu_custom_call.1} parent=1 // pred_region
      _
    $region21: #{tpu_custom_call.1} parent=1 // pred_fallthru
      _
    // Predicated region
    $region22: #{tpu_custom_call.1} parent=1 // pred_check
      _
    $region23: #{tpu_custom_call.1} parent=1 // pred_check_branch
      %61 = sbr.rel (0) target = $region25
    $region24: #{tpu_custom_call.1} parent=1 // pred_region
      %62 = dma.done [#allocation4], 64
    $region25: #{tpu_custom_call.1} parent=1 // pred_fallthru
      _
    // Predicated region
    $region26: #{tpu_custom_call.1} parent=1 // pred_check
      _
    $region27: #{tpu_custom_call.1} parent=1 // pred_check_branch
      %64 = sbr.rel (0) target = $region29
    $region28: #{tpu_custom_call.1} parent=1 // pred_region
      %65 = dma.done [#allocation7], 4096
    $region29: #{tpu_custom_call.1} parent=1 // pred_fallthru
      _
    // Predicated region
    $region30: #{tpu_custom_call.1} parent=1 // pred_check
      _
    $region31: #{tpu_custom_call.1} parent=1 // pred_check_branch
      %67 = sbr.rel (0) target = $region33
    $region32: #{tpu_custom_call.1} parent=1 // pred_region
      %68 = dma.done [#allocation7], 256
    $region33: #{tpu_custom_call.1} parent=1 // pred_fallthru
      _
    // Predicated region
    $region34: #{tpu_custom_call.1} parent=1 // pred_check
      _
    $region35: #{tpu_custom_call.1} parent=1 // pred_check_branch
      %70 = sbr.rel (0) target = $region37
    $region36: #{tpu_custom_call.1} parent=1 // pred_region
      %71 = dma.done [#allocation10], 2048
    $region37: #{tpu_custom_call.1} parent=1 // pred_fallthru
      _
    %v73 = vld [vmem:[#allocation3] sm:$0xf]
    %v74 = vld [vmem:[#allocation6] sm:$0xff]
    %v75 = vld [vmem:[#allocation6 + $0x8] sm:$0xff]
    %v76 = vld [vmem:[#allocation6 + $0x10] sm:$0xff]
    %v77 = vld [vmem:[#allocation6 + $0x18] sm:$0xff]
    %v78 = vld [vmem:[#allocation6 + $0x20] sm:$0xff]
    %v79 = vld [vmem:[#allocation6 + $0x28] sm:$0xff]
    %v80 = vld [vmem:[#allocation6 + $0x30] sm:$0xff]
    %v81 = vld [vmem:[#allocation6 + $0x38] sm:$0xff]
    %v82 = vld [vmem:[#allocation6 + $0x40] sm:$0xff]
    %v83 = vld [vmem:[#allocation6 + $0x48] sm:$0xff]
    %v84 = vld [vmem:[#allocation6 + $0x50] sm:$0xff]
    %v85 = vld [vmem:[#allocation6 + $0x58] sm:$0xff]
    %v86 = vld [vmem:[#allocation6 + $0x60] sm:$0xff]
    %v87 = vld [vmem:[#allocation6 + $0x68] sm:$0xff]
    %v88 = vld [vmem:[#allocation6 + $0x70] sm:$0xff]
    %v89 = vld [vmem:[#allocation6 + $0x78] sm:$0xff]
    %v90 = vld [vmem:[#allocation6 + $0x80] sm:$0xff]
    %v91 = vld [vmem:[#allocation6 + $0x88] sm:$0xff]
    %v92 = vld [vmem:[#allocation6 + $0x90] sm:$0xff]
    %v93 = vld [vmem:[#allocation6 + $0x98] sm:$0xff]
    %v94 = vld [vmem:[#allocation6 + $0xa0] sm:$0xff]
    %v95 = vld [vmem:[#allocation6 + $0xa8] sm:$0xff]
    %v96 = vld [vmem:[#allocation6 + $0xb0] sm:$0xff]
    %v97 = vld [vmem:[#allocation6 + $0xb8] sm:$0xff]
    %v98 = vld [vmem:[#allocation6 + $0xc0] sm:$0xff]
    %v99 = vld [vmem:[#allocation6 + $0xc8] sm:$0xff]
    %v100 = vld [vmem:[#allocation6 + $0xd0] sm:$0xff]
    %v101 = vld [vmem:[#allocation6 + $0xd8] sm:$0xff]
    %v102 = vld [vmem:[#allocation6 + $0xe0] sm:$0xff]
    %v103 = vld [vmem:[#allocation6 + $0xe8] sm:$0xff]
    %v104 = vld [vmem:[#allocation6 + $0xf0] sm:$0xff]
    %v105 = vld [vmem:[#allocation6 + $0xf8] sm:$0xff]
    %v106 = vld [vmem:[#allocation8] sm:$0xff]
    %v107 = vld [vmem:[#allocation8 + $0x8] sm:$0xff]
    %v110 = vlaneseq
    %v111 = vshrl.u32 %v110, 7
    %v112 = vsub.s32 0, %v111
    %v113 = vrot.slane %v106, %v112
    %v114 = vlaneseq
    %v115 = vshrl.u32 %v114, 7
    %v116 = vsub.s32 1, %v115
    %v117 = vrot.slane %v106, %v116
    %v118 = vlaneseq
    %v119 = vshrl.u32 %v118, 7
    %v120 = vsub.s32 2, %v119
    %v121 = vrot.slane %v106, %v120
    %v122 = vlaneseq
    %v123 = vshrl.u32 %v122, 7
    %v124 = vsub.s32 3, %v123
    %v125 = vrot.slane %v106, %v124
    %v126 = vlaneseq
    %v127 = vshrl.u32 %v126, 7
    %v128 = vsub.s32 4, %v127
    %v129 = vrot.slane %v106, %v128
    %v130 = vlaneseq
    %v131 = vshrl.u32 %v130, 7
    %v132 = vsub.s32 5, %v131
    %v133 = vrot.slane %v106, %v132
    %v134 = vlaneseq
    %v135 = vshrl.u32 %v134, 7
    %v136 = vsub.s32 6, %v135
    %v137 = vrot.slane %v106, %v136
    %v138 = vlaneseq
    %v139 = vshrl.u32 %v138, 7
    %v140 = vsub.s32 7, %v139
    %v141 = vrot.slane %v106, %v140
    %v142 = vlaneseq
    %v143 = vshrl.u32 %v142, 7
    %v144 = vsub.s32 0, %v143
    %v145 = vrot.slane %v107, %v144
    %v146 = vlaneseq
    %v147 = vshrl.u32 %v146, 7
    %v148 = vsub.s32 1, %v147
    %v149 = vrot.slane %v107, %v148
    %v150 = vlaneseq
    %v151 = vshrl.u32 %v150, 7
    %v152 = vsub.s32 2, %v151
    %v153 = vrot.slane %v107, %v152
    %v154 = vlaneseq
    %v155 = vshrl.u32 %v154, 7
    %v156 = vsub.s32 3, %v155
    %v157 = vrot.slane %v107, %v156
    %v158 = vlaneseq
    %v159 = vshrl.u32 %v158, 7
    %v160 = vsub.s32 4, %v159
    %v161 = vrot.slane %v107, %v160
    %v162 = vlaneseq
    %v163 = vshrl.u32 %v162, 7
    %v164 = vsub.s32 5, %v163
    %v165 = vrot.slane %v107, %v164
    %v166 = vlaneseq
    %v167 = vshrl.u32 %v166, 7
    %v168 = vsub.s32 6, %v167
    %v169 = vrot.slane %v107, %v168
    %v170 = vlaneseq
    %v171 = vshrl.u32 %v170, 7
    %v172 = vsub.s32 7, %v171
    %v173 = vrot.slane %v107, %v172
    %v222 = vunpack.c.l.b16 %v74
    %v223 = vunpack.c.h.b16 %v74
    %v224 = vunpack.c.l.b16 %v75
    %v225 = vunpack.c.h.b16 %v75
    %v226 = vunpack.c.l.b16 %v76
    %v227 = vunpack.c.h.b16 %v76
    %v228 = vunpack.c.l.b16 %v77
    %v229 = vunpack.c.h.b16 %v77
    %v230 = vunpack.c.l.b16 %v78
    %v231 = vunpack.c.h.b16 %v78
    %v232 = vunpack.c.l.b16 %v79
    %v233 = vunpack.c.h.b16 %v79
    %v234 = vunpack.c.l.b16 %v80
    %v235 = vunpack.c.h.b16 %v80
    %v236 = vunpack.c.l.b16 %v81
    %v237 = vunpack.c.h.b16 %v81
    %v238 = vunpack.c.l.b16 %v82
    %v239 = vunpack.c.h.b16 %v82
    %v240 = vunpack.c.l.b16 %v83
    %v241 = vunpack.c.h.b16 %v83
    %v242 = vunpack.c.l.b16 %v84
    %v243 = vunpack.c.h.b16 %v84
    %v244 = vunpack.c.l.b16 %v85
    %v245 = vunpack.c.h.b16 %v85
    %v246 = vunpack.c.l.b16 %v86
    %v247 = vunpack.c.h.b16 %v86
    %v248 = vunpack.c.l.b16 %v87
    %v249 = vunpack.c.h.b16 %v87
    %v250 = vunpack.c.l.b16 %v88
    %v251 = vunpack.c.h.b16 %v88
    %v252 = vunpack.c.l.b16 %v89
    %v253 = vunpack.c.h.b16 %v89
    %v254 = vunpack.c.l.b16 %v90
    %v255 = vunpack.c.h.b16 %v90
    %v256 = vunpack.c.l.b16 %v91
    %v257 = vunpack.c.h.b16 %v91
    %v258 = vunpack.c.l.b16 %v92
    %v259 = vunpack.c.h.b16 %v92
    %v260 = vunpack.c.l.b16 %v93
    %v261 = vunpack.c.h.b16 %v93
    %v262 = vunpack.c.l.b16 %v94
    %v263 = vunpack.c.h.b16 %v94
    %v264 = vunpack.c.l.b16 %v95
    %v265 = vunpack.c.h.b16 %v95
    %v266 = vunpack.c.l.b16 %v96
    %v267 = vunpack.c.h.b16 %v96
    %v268 = vunpack.c.l.b16 %v97
    %v269 = vunpack.c.h.b16 %v97
    %v270 = vunpack.c.l.b16 %v98
    %v271 = vunpack.c.h.b16 %v98
    %v272 = vunpack.c.l.b16 %v99
    %v273 = vunpack.c.h.b16 %v99
    %v274 = vunpack.c.l.b16 %v100
    %v275 = vunpack.c.h.b16 %v100
    %v276 = vunpack.c.l.b16 %v101
    %v277 = vunpack.c.h.b16 %v101
    %v278 = vunpack.c.l.b16 %v102
    %v279 = vunpack.c.h.b16 %v102
    %v280 = vunpack.c.l.b16 %v103
    %v281 = vunpack.c.h.b16 %v103
    %v282 = vunpack.c.l.b16 %v104
    %v283 = vunpack.c.h.b16 %v104
    %v284 = vunpack.c.l.b16 %v105
    %v285 = vunpack.c.h.b16 %v105
    %v286 = vpack.c.b16 %v238, %v222
    %v287 = vpack.c.b16 %v239, %v223
    %v288 = vpack.c.b16 %v240, %v224
    %v289 = vpack.c.b16 %v241, %v225
    %v290 = vpack.c.b16 %v242, %v226
    %v291 = vpack.c.b16 %v243, %v227
    %v292 = vpack.c.b16 %v244, %v228
    %v293 = vpack.c.b16 %v245, %v229
    %v294 = vpack.c.b16 %v246, %v230
    %v295 = vpack.c.b16 %v247, %v231
    %v296 = vpack.c.b16 %v248, %v232
    %v297 = vpack.c.b16 %v249, %v233
    %v298 = vpack.c.b16 %v250, %v234
    %v299 = vpack.c.b16 %v251, %v235
    %v300 = vpack.c.b16 %v252, %v236
    %v301 = vpack.c.b16 %v253, %v237
    %v302 = vpack.c.b16 %v270, %v254
    %v303 = vpack.c.b16 %v271, %v255
    %v304 = vpack.c.b16 %v272, %v256
    %v305 = vpack.c.b16 %v273, %v257
    %v306 = vpack.c.b16 %v274, %v258
    %v307 = vpack.c.b16 %v275, %v259
    %v308 = vpack.c.b16 %v276, %v260
    %v309 = vpack.c.b16 %v277, %v261
    %v310 = vpack.c.b16 %v278, %v262
    %v311 = vpack.c.b16 %v279, %v263
    %v312 = vpack.c.b16 %v280, %v264
    %v313 = vpack.c.b16 %v281, %v265
    %v314 = vpack.c.b16 %v282, %v266
    %v315 = vpack.c.b16 %v283, %v267
    %v316 = vpack.c.b16 %v284, %v268
    %v317 = vpack.c.b16 %v285, %v269
    %vm350 = vcmask 261120
    %v352 = vsel %vm350, %v73, 0
    %354 = vmatprep.subr.bf16.mxu0 0
    %355 = vmatpush1.bf16.msra.mxu0 0
    %356 = vmatprep.subr.bf16.mxu0 0
    %357 = vmatpush1.bf16.msra.mxu0 0
    %358 = vmatprep.subr.bf16.mxu0 0
    %359 = vmatpush1.bf16.msra.mxu0 0
    %360 = vmatprep.subr.bf16.mxu0 0
    %361 = vmatpush1.bf16.msra.mxu0 0
    %362 = vmatprep.subr.bf16.mxu0 0
    %363 = vmatpush1.bf16.msra.mxu0 0
    %364 = vmatprep.subr.bf16.mxu0 0
    %365 = vmatpush1.bf16.msra.mxu0 0
    %366 = vmatprep.subr.bf16.mxu0 %v303
    %367 = vmatpush1.bf16.msra.mxu0 %v302
    %368 = vmatprep.subr.bf16.mxu0 %v287
    %369 = vmatpush1.bf16.msra.mxu0 %v286
    %370 = vmatprep.subr.bf16.mxu0 0
    %371 = vmatpush2.bf16.msra.mxu0 0
    %372 = vmatprep.subr.bf16.mxu0 0
    %373 = vmatpush2.bf16.msra.mxu0 0
    %374 = vmatprep.subr.bf16.mxu0 0
    %375 = vmatpush2.bf16.msra.mxu0 0
    %376 = vmatprep.subr.bf16.mxu0 0
    %377 = vmatpush2.bf16.msra.mxu0 0
    %378 = vmatprep.subr.bf16.mxu0 0
    %379 = vmatpush2.bf16.msra.mxu0 0
    %380 = vmatprep.subr.bf16.mxu0 0
    %381 = vmatpush2.bf16.msra.mxu0 0
    %382 = vmatprep.subr.bf16.mxu0 0
    %383 = vmatpush2.bf16.msra.mxu0 0
    %384 = vmatprep.subr.bf16.mxu0 0
    %385 = vmatpush2.bf16.msra.mxu0 0
    %386 = vmatprep.mubr.bf16.mxu0 0
    %387 = vmatmul.mubr.bf16.gmra.mxu0 %v352
    %v388 = vpop.f32.mrf.mxu0
    %v389 = vadd.f32 %v113, %v388
    %v390 = vpop.f32.mrf.mxu0
    %v391 = vadd.f32 %v117, %v390
    %v392 = vpop.f32.mrf.mxu0
    %v393 = vpop.f32.mrf.mxu0
    %394 = vdwg.mxu0
    %395 = vmatprep.subr.bf16.mxu0 0
    %396 = vmatpush1.bf16.msra.mxu0 0
    %397 = vmatprep.subr.bf16.mxu0 0
    %398 = vmatpush1.bf16.msra.mxu0 0
    %399 = vmatprep.subr.bf16.mxu0 0
    %400 = vmatpush1.bf16.msra.mxu0 0
    %401 = vmatprep.subr.bf16.mxu0 0
    %402 = vmatpush1.bf16.msra.mxu0 0
    %403 = vmatprep.subr.bf16.mxu0 0
    %404 = vmatpush1.bf16.msra.mxu0 0
    %405 = vmatprep.subr.bf16.mxu0 0
    %406 = vmatpush1.bf16.msra.mxu0 0
    %407 = vmatprep.subr.bf16.mxu0 %v305
    %408 = vmatpush1.bf16.msra.mxu0 %v304
    %409 = vmatprep.subr.bf16.mxu0 %v289
    %410 = vmatpush1.bf16.msra.mxu0 %v288
    %411 = vmatprep.subr.bf16.mxu0 0
    %412 = vmatpush2.bf16.msra.mxu0 0
    %413 = vmatprep.subr.bf16.mxu0 0
    %414 = vmatpush2.bf16.msra.mxu0 0
    %415 = vmatprep.subr.bf16.mxu0 0
    %416 = vmatpush2.bf16.msra.mxu0 0
    %417 = vmatprep.subr.bf16.mxu0 0
    %418 = vmatpush2.bf16.msra.mxu0 0
    %419 = vmatprep.subr.bf16.mxu0 0
    %420 = vmatpush2.bf16.msra.mxu0 0
    %421 = vmatprep.subr.bf16.mxu0 0
    %422 = vmatpush2.bf16.msra.mxu0 0
    %423 = vmatprep.subr.bf16.mxu0 0
    %424 = vmatpush2.bf16.msra.mxu0 0
    %425 = vmatprep.subr.bf16.mxu0 0
    %426 = vmatpush2.bf16.msra.mxu0 0
    %427 = vmatprep.mubr.bf16.mxu0 0
    %428 = vmatmul.mubr.bf16.gmra.mxu0 %v352
    %v429 = vpop.f32.mrf.mxu0
    %v430 = vadd.f32 %v121, %v429
    %v431 = vpop.f32.mrf.mxu0
    %v432 = vadd.f32 %v125, %v431
    %v433 = vpop.f32.mrf.mxu0
    %v434 = vpop.f32.mrf.mxu0
    %435 = vdwg.mxu0
    %436 = vmatprep.subr.bf16.mxu0 0
    %437 = vmatpush1.bf16.msra.mxu0 0
    %438 = vmatprep.subr.bf16.mxu0 0
    %439 = vmatpush1.bf16.msra.mxu0 0
    %440 = vmatprep.subr.bf16.mxu0 0
    %441 = vmatpush1.bf16.msra.mxu0 0
    %442 = vmatprep.subr.bf16.mxu0 0
    %443 = vmatpush1.bf16.msra.mxu0 0
    %444 = vmatprep.subr.bf16.mxu0 0
    %445 = vmatpush1.bf16.msra.mxu0 0
    %446 = vmatprep.subr.bf16.mxu0 0
    %447 = vmatpush1.bf16.msra.mxu0 0
    %448 = vmatprep.subr.bf16.mxu0 %v307
    %449 = vmatpush1.bf16.msra.mxu0 %v306
    %450 = vmatprep.subr.bf16.mxu0 %v291
    %451 = vmatpush1.bf16.msra.mxu0 %v290
    %452 = vmatprep.subr.bf16.mxu0 0
    %453 = vmatpush2.bf16.msra.mxu0 0
    %454 = vmatprep.subr.bf16.mxu0 0
    %455 = vmatpush2.bf16.msra.mxu0 0
    %456 = vmatprep.subr.bf16.mxu0 0
    %457 = vmatpush2.bf16.msra.mxu0 0
    %458 = vmatprep.subr.bf16.mxu0 0
    %459 = vmatpush2.bf16.msra.mxu0 0
    %460 = vmatprep.subr.bf16.mxu0 0
    %461 = vmatpush2.bf16.msra.mxu0 0
    %462 = vmatprep.subr.bf16.mxu0 0
    %463 = vmatpush2.bf16.msra.mxu0 0
    %464 = vmatprep.subr.bf16.mxu0 0
    %465 = vmatpush2.bf16.msra.mxu0 0
    %466 = vmatprep.subr.bf16.mxu0 0
    %467 = vmatpush2.bf16.msra.mxu0 0
    %468 = vmatprep.mubr.bf16.mxu0 0
    %469 = vmatmul.mubr.bf16.gmra.mxu0 %v352
    %v470 = vpop.f32.mrf.mxu0
    %v471 = vadd.f32 %v129, %v470
    %v472 = vpop.f32.mrf.mxu0
    %v473 = vadd.f32 %v133, %v472
    %v474 = vpop.f32.mrf.mxu0
    %v475 = vpop.f32.mrf.mxu0
    %476 = vdwg.mxu0
    %477 = vmatprep.subr.bf16.mxu0 0
    %478 = vmatpush1.bf16.msra.mxu0 0
    %479 = vmatprep.subr.bf16.mxu0 0
    %480 = vmatpush1.bf16.msra.mxu0 0
    %481 = vmatprep.subr.bf16.mxu0 0
    %482 = vmatpush1.bf16.msra.mxu0 0
    %483 = vmatprep.subr.bf16.mxu0 0
    %484 = vmatpush1.bf16.msra.mxu0 0
    %485 = vmatprep.subr.bf16.mxu0 0
    %486 = vmatpush1.bf16.msra.mxu0 0
    %487 = vmatprep.subr.bf16.mxu0 0
    %488 = vmatpush1.bf16.msra.mxu0 0
    %489 = vmatprep.subr.bf16.mxu0 %v309
    %490 = vmatpush1.bf16.msra.mxu0 %v308
    %491 = vmatprep.subr.bf16.mxu0 %v293
    %492 = vmatpush1.bf16.msra.mxu0 %v292
    %493 = vmatprep.subr.bf16.mxu0 0
    %494 = vmatpush2.bf16.msra.mxu0 0
    %495 = vmatprep.subr.bf16.mxu0 0
    %496 = vmatpush2.bf16.msra.mxu0 0
    %497 = vmatprep.subr.bf16.mxu0 0
    %498 = vmatpush2.bf16.msra.mxu0 0
    %499 = vmatprep.subr.bf16.mxu0 0
    %500 = vmatpush2.bf16.msra.mxu0 0
    %501 = vmatprep.subr.bf16.mxu0 0
    %502 = vmatpush2.bf16.msra.mxu0 0
    %503 = vmatprep.subr.bf16.mxu0 0
    %504 = vmatpush2.bf16.msra.mxu0 0
    %505 = vmatprep.subr.bf16.mxu0 0
    %506 = vmatpush2.bf16.msra.mxu0 0
    %507 = vmatprep.subr.bf16.mxu0 0
    %508 = vmatpush2.bf16.msra.mxu0 0
    %509 = vmatprep.mubr.bf16.mxu0 0
    %510 = vmatmul.mubr.bf16.gmra.mxu0 %v352
    %v511 = vpop.f32.mrf.mxu0
    %v512 = vadd.f32 %v137, %v511
    %v513 = vpop.f32.mrf.mxu0
    %v514 = vadd.f32 %v141, %v513
    %v515 = vpop.f32.mrf.mxu0
    %v516 = vpop.f32.mrf.mxu0
    %517 = vdwg.mxu0
    %518 = vmatprep.subr.bf16.mxu0 0
    %519 = vmatpush1.bf16.msra.mxu0 0
    %520 = vmatprep.subr.bf16.mxu0 0
    %521 = vmatpush1.bf16.msra.mxu0 0
    %522 = vmatprep.subr.bf16.mxu0 0
    %523 = vmatpush1.bf16.msra.mxu0 0
    %524 = vmatprep.subr.bf16.mxu0 0
    %525 = vmatpush1.bf16.msra.mxu0 0
    %526 = vmatprep.subr.bf16.mxu0 0
    %527 = vmatpush1.bf16.msra.mxu0 0
    %528 = vmatprep.subr.bf16.mxu0 0
    %529 = vmatpush1.bf16.msra.mxu0 0
    %530 = vmatprep.subr.bf16.mxu0 %v311
    %531 = vmatpush1.bf16.msra.mxu0 %v310
    %532 = vmatprep.subr.bf16.mxu0 %v295
    %533 = vmatpush1.bf16.msra.mxu0 %v294
    %534 = vmatprep.subr.bf16.mxu0 0
    %535 = vmatpush2.bf16.msra.mxu0 0
    %536 = vmatprep.subr.bf16.mxu0 0
    %537 = vmatpush2.bf16.msra.mxu0 0
    %538 = vmatprep.subr.bf16.mxu0 0
    %539 = vmatpush2.bf16.msra.mxu0 0
    %540 = vmatprep.subr.bf16.mxu0 0
    %541 = vmatpush2.bf16.msra.mxu0 0
    %542 = vmatprep.subr.bf16.mxu0 0
    %543 = vmatpush2.bf16.msra.mxu0 0
    %544 = vmatprep.subr.bf16.mxu0 0
    %545 = vmatpush2.bf16.msra.mxu0 0
    %546 = vmatprep.subr.bf16.mxu0 0
    %547 = vmatpush2.bf16.msra.mxu0 0
    %548 = vmatprep.subr.bf16.mxu0 0
    %549 = vmatpush2.bf16.msra.mxu0 0
    %550 = vmatprep.mubr.bf16.mxu0 0
    %551 = vmatmul.mubr.bf16.gmra.mxu0 %v352
    %v552 = vpop.f32.mrf.mxu0
    %v553 = vadd.f32 %v145, %v552
    %v554 = vpop.f32.mrf.mxu0
    %v555 = vadd.f32 %v149, %v554
    %v556 = vpop.f32.mrf.mxu0
    %v557 = vpop.f32.mrf.mxu0
    %558 = vdwg.mxu0
    %559 = vmatprep.subr.bf16.mxu0 0
    %560 = vmatpush1.bf16.msra.mxu0 0
    %561 = vmatprep.subr.bf16.mxu0 0
    %562 = vmatpush1.bf16.msra.mxu0 0
    %563 = vmatprep.subr.bf16.mxu0 0
    %564 = vmatpush1.bf16.msra.mxu0 0
    %565 = vmatprep.subr.bf16.mxu0 0
    %566 = vmatpush1.bf16.msra.mxu0 0
    %567 = vmatprep.subr.bf16.mxu0 0
    %568 = vmatpush1.bf16.msra.mxu0 0
    %569 = vmatprep.subr.bf16.mxu0 0
    %570 = vmatpush1.bf16.msra.mxu0 0
    %571 = vmatprep.subr.bf16.mxu0 %v313
    %572 = vmatpush1.bf16.msra.mxu0 %v312
    %573 = vmatprep.subr.bf16.mxu0 %v297
    %574 = vmatpush1.bf16.msra.mxu0 %v296
    %575 = vmatprep.subr.bf16.mxu0 0
    %576 = vmatpush2.bf16.msra.mxu0 0
    %577 = vmatprep.subr.bf16.mxu0 0
    %578 = vmatpush2.bf16.msra.mxu0 0
    %579 = vmatprep.subr.bf16.mxu0 0
    %580 = vmatpush2.bf16.msra.mxu0 0
    %581 = vmatprep.subr.bf16.mxu0 0
    %582 = vmatpush2.bf16.msra.mxu0 0
    %583 = vmatprep.subr.bf16.mxu0 0
    %584 = vmatpush2.bf16.msra.mxu0 0
    %585 = vmatprep.subr.bf16.mxu0 0
    %586 = vmatpush2.bf16.msra.mxu0 0
    %587 = vmatprep.subr.bf16.mxu0 0
    %588 = vmatpush2.bf16.msra.mxu0 0
    %589 = vmatprep.subr.bf16.mxu0 0
    %590 = vmatpush2.bf16.msra.mxu0 0
    %591 = vmatprep.mubr.bf16.mxu0 0
    %592 = vmatmul.mubr.bf16.gmra.mxu0 %v352
    %v593 = vpop.f32.mrf.mxu0
    %v594 = vadd.f32 %v153, %v593
    %v595 = vpop.f32.mrf.mxu0
    %v596 = vadd.f32 %v157, %v595
    %v597 = vpop.f32.mrf.mxu0
    %v598 = vpop.f32.mrf.mxu0
    %599 = vdwg.mxu0
    %600 = vmatprep.subr.bf16.mxu0 0
    %601 = vmatpush1.bf16.msra.mxu0 0
    %602 = vmatprep.subr.bf16.mxu0 0
    %603 = vmatpush1.bf16.msra.mxu0 0
    %604 = vmatprep.subr.bf16.mxu0 0
    %605 = vmatpush1.bf16.msra.mxu0 0
    %606 = vmatprep.subr.bf16.mxu0 0
    %607 = vmatpush1.bf16.msra.mxu0 0
    %608 = vmatprep.subr.bf16.mxu0 0
    %609 = vmatpush1.bf16.msra.mxu0 0
    %610 = vmatprep.subr.bf16.mxu0 0
    %611 = vmatpush1.bf16.msra.mxu0 0
    %612 = vmatprep.subr.bf16.mxu0 %v315
    %613 = vmatpush1.bf16.msra.mxu0 %v314
    %614 = vmatprep.subr.bf16.mxu0 %v299
    %615 = vmatpush1.bf16.msra.mxu0 %v298
    %616 = vmatprep.subr.bf16.mxu0 0
    %617 = vmatpush2.bf16.msra.mxu0 0
    %618 = vmatprep.subr.bf16.mxu0 0
    %619 = vmatpush2.bf16.msra.mxu0 0
    %620 = vmatprep.subr.bf16.mxu0 0
    %621 = vmatpush2.bf16.msra.mxu0 0
    %622 = vmatprep.subr.bf16.mxu0 0
    %623 = vmatpush2.bf16.msra.mxu0 0
    %624 = vmatprep.subr.bf16.mxu0 0
    %625 = vmatpush2.bf16.msra.mxu0 0
    %626 = vmatprep.subr.bf16.mxu0 0
    %627 = vmatpush2.bf16.msra.mxu0 0
    %628 = vmatprep.subr.bf16.mxu0 0
    %629 = vmatpush2.bf16.msra.mxu0 0
    %630 = vmatprep.subr.bf16.mxu0 0
    %631 = vmatpush2.bf16.msra.mxu0 0
    %632 = vmatprep.mubr.bf16.mxu0 0
    %633 = vmatmul.mubr.bf16.gmra.mxu0 %v352
    %v634 = vpop.f32.mrf.mxu0
    %v635 = vadd.f32 %v161, %v634
    %v636 = vpop.f32.mrf.mxu0
    %v637 = vadd.f32 %v165, %v636
    %v638 = vpop.f32.mrf.mxu0
    %v639 = vpop.f32.mrf.mxu0
    %640 = vdwg.mxu0
    %641 = vmatprep.subr.bf16.mxu0 0
    %642 = vmatpush1.bf16.msra.mxu0 0
    %643 = vmatprep.subr.bf16.mxu0 0
    %644 = vmatpush1.bf16.msra.mxu0 0
    %645 = vmatprep.subr.bf16.mxu0 0
    %646 = vmatpush1.bf16.msra.mxu0 0
    %647 = vmatprep.subr.bf16.mxu0 0
    %648 = vmatpush1.bf16.msra.mxu0 0
    %649 = vmatprep.subr.bf16.mxu0 0
    %650 = vmatpush1.bf16.msra.mxu0 0
    %651 = vmatprep.subr.bf16.mxu0 0
    %652 = vmatpush1.bf16.msra.mxu0 0
    %653 = vmatprep.subr.bf16.mxu0 %v317
    %654 = vmatpush1.bf16.msra.mxu0 %v316
    %655 = vmatprep.subr.bf16.mxu0 %v301
    %656 = vmatpush1.bf16.msra.mxu0 %v300
    %657 = vmatprep.subr.bf16.mxu0 0
    %658 = vmatpush2.bf16.msra.mxu0 0
    %659 = vmatprep.subr.bf16.mxu0 0
    %660 = vmatpush2.bf16.msra.mxu0 0
    %661 = vmatprep.subr.bf16.mxu0 0
    %662 = vmatpush2.bf16.msra.mxu0 0
    %663 = vmatprep.subr.bf16.mxu0 0
    %664 = vmatpush2.bf16.msra.mxu0 0
    %665 = vmatprep.subr.bf16.mxu0 0
    %666 = vmatpush2.bf16.msra.mxu0 0
    %667 = vmatprep.subr.bf16.mxu0 0
    %668 = vmatpush2.bf16.msra.mxu0 0
    %669 = vmatprep.subr.bf16.mxu0 0
    %670 = vmatpush2.bf16.msra.mxu0 0
    %671 = vmatprep.subr.bf16.mxu0 0
    %672 = vmatpush2.bf16.msra.mxu0 0
    %673 = vmatprep.mubr.bf16.mxu0 0
    %674 = vmatmul.mubr.bf16.gmra.mxu0 %v352
    %v675 = vpop.f32.mrf.mxu0
    %v676 = vadd.f32 %v169, %v675
    %v677 = vpop.f32.mrf.mxu0
    %v678 = vadd.f32 %v173, %v677
    %v679 = vpop.f32.mrf.mxu0
    %v680 = vpop.f32.mrf.mxu0
    %681 = vdwg.mxu0
    %v682 = vmax.f32 %v389, 0.0
    %v683 = vmax.f32 %v391, 0.0
    %v684 = vmax.f32 %v430, 0.0
    %v685 = vmax.f32 %v432, 0.0
    %v686 = vmax.f32 %v471, 0.0
    %v687 = vmax.f32 %v473, 0.0
    %v688 = vmax.f32 %v512, 0.0
    %v689 = vmax.f32 %v514, 0.0
    %v690 = vmax.f32 %v553, 0.0
    %v691 = vmax.f32 %v555, 0.0
    %v692 = vmax.f32 %v594, 0.0
    %v693 = vmax.f32 %v596, 0.0
    %v694 = vmax.f32 %v635, 0.0
    %v695 = vmax.f32 %v637, 0.0
    %v696 = vmax.f32 %v676, 0.0
    %v697 = vmax.f32 %v678, 0.0
    %v698 = vpack.c.bf16 %v682, %v682
    %v699 = vpack.c.bf16 %v683, %v683
    %v700 = vpack.c.bf16 %v684, %v684
    %v701 = vpack.c.bf16 %v685, %v685
    %v702 = vpack.c.bf16 %v686, %v686
    %v703 = vpack.c.bf16 %v687, %v687
    %v704 = vpack.c.bf16 %v688, %v688
    %v705 = vpack.c.bf16 %v689, %v689
    %v706 = vpack.c.bf16 %v690, %v690
    %v707 = vpack.c.bf16 %v691, %v691
    %v708 = vpack.c.bf16 %v692, %v692
    %v709 = vpack.c.bf16 %v693, %v693
    %v710 = vpack.c.bf16 %v694, %v694
    %v711 = vpack.c.bf16 %v695, %v695
    %v712 = vpack.c.bf16 %v696, %v696
    %v713 = vpack.c.bf16 %v697, %v697
    %v714 = vld [vmem:[#allocation9] sm:$0xf]
    %v715 = vld [vmem:[#allocation9 + $0x4] sm:$0xf]
    %v718 = vunpack.c.l.b16 %v714
    %v719 = vunpack.c.l.b16 %v715
    %v720 = vpack.c.b16 %v719, %v718
    %722 = vmatprep.subr.bf16.mxu0 0
    %723 = vmatpush1.bf16.xpose.msra.mxu0 0
    %724 = vmatprep.subr.bf16.mxu0 0
    %725 = vmatpush1.bf16.xpose.msra.mxu0 0
    %726 = vmatprep.subr.bf16.mxu0 0
    %727 = vmatpush1.bf16.xpose.msra.mxu0 0
    %728 = vmatprep.subr.bf16.mxu0 0
    %729 = vmatpush1.bf16.xpose.msra.mxu0 0
    %730 = vmatprep.subr.bf16.mxu0 0
    %731 = vmatpush1.bf16.xpose.msra.mxu0 0
    %732 = vmatprep.subr.bf16.mxu0 0
    %733 = vmatpush1.bf16.xpose.msra.mxu0 0
    %734 = vmatprep.subr.bf16.mxu0 0
    %735 = vmatpush1.bf16.xpose.msra.mxu0 0
    %736 = vmatprep.subr.bf16.mxu0 0
    %737 = vmatpush1.bf16.xpose.msra.mxu0 %v720
    %738 = vmatprep.subr.bf16.mxu0 0
    %739 = vmatpush2.bf16.xpose.msra.mxu0 0
    %740 = vmatprep.subr.bf16.mxu0 0
    %741 = vmatpush2.bf16.xpose.msra.mxu0 0
    %742 = vmatprep.subr.bf16.mxu0 0
    %743 = vmatpush2.bf16.xpose.msra.mxu0 0
    %744 = vmatprep.subr.bf16.mxu0 0
    %745 = vmatpush2.bf16.xpose.msra.mxu0 0
    %746 = vmatprep.subr.bf16.mxu0 0
    %747 = vmatpush2.bf16.xpose.msra.mxu0 0
    %748 = vmatprep.subr.bf16.mxu0 0
    %749 = vmatpush2.bf16.xpose.msra.mxu0 0
    %750 = vmatprep.subr.bf16.mxu0 0
    %751 = vmatpush2.bf16.xpose.msra.mxu0 0
    %752 = vmatprep.subr.bf16.mxu0 0
    %753 = vmatpush2.bf16.xpose.msra.mxu0 0
    %754 = vmatprep.mubr.bf16.mxu0 0
    %755 = vmatmul.mubr.bf16.gmra.mxu0 %v698
    %v756 = vpop.f32.mrf.mxu0
    %v757 = vadd.f32 0.0, %v756
    %v758 = vpop.f32.mrf.mxu0
    %v759 = vpop.f32.mrf.mxu0
    %v760 = vpop.f32.mrf.mxu0
    %761 = vdwg.mxu0
    %vm762 = vcmask 130048
    %763 = vst.msk [vmem:[#allocation2] sm:$0xff] %vm762, %v757
    %s764 = scalar_lea.vmem [#allocation9], 8
    %v765 = vld [vmem:[%s764] sm:$0xf]
    %v766 = vld [vmem:[%s764 + $0x4] sm:$0xf]
    %v769 = vunpack.c.l.b16 %v765
    %v770 = vunpack.c.l.b16 %v766
    %v771 = vpack.c.b16 %v770, %v769
    %773 = vmatprep.subr.bf16.mxu0 0
    %774 = vmatpush1.bf16.xpose.msra.mxu0 0
    %775 = vmatprep.subr.bf16.mxu0 0
    %776 = vmatpush1.bf16.xpose.msra.mxu0 0
    %777 = vmatprep.subr.bf16.mxu0 0
    %778 = vmatpush1.bf16.xpose.msra.mxu0 0
    %779 = vmatprep.subr.bf16.mxu0 0
    %780 = vmatpush1.bf16.xpose.msra.mxu0 0
    %781 = vmatprep.subr.bf16.mxu0 0
    %782 = vmatpush1.bf16.xpose.msra.mxu0 0
    %783 = vmatprep.subr.bf16.mxu0 0
    %784 = vmatpush1.bf16.xpose.msra.mxu0 0
    %785 = vmatprep.subr.bf16.mxu0 0
    %786 = vmatpush1.bf16.xpose.msra.mxu0 0
    %787 = vmatprep.subr.bf16.mxu0 0
    %788 = vmatpush1.bf16.xpose.msra.mxu0 %v771
    %789 = vmatprep.subr.bf16.mxu0 0
    %790 = vmatpush2.bf16.xpose.msra.mxu0 0
    %791 = vmatprep.subr.bf16.mxu0 0
    %792 = vmatpush2.bf16.xpose.msra.mxu0 0
    %793 = vmatprep.subr.bf16.mxu0 0
    %794 = vmatpush2.bf16.xpose.msra.mxu0 0
    %795 = vmatprep.subr.bf16.mxu0 0
    %796 = vmatpush2.bf16.xpose.msra.mxu0 0
    %797 = vmatprep.subr.bf16.mxu0 0
    %798 = vmatpush2.bf16.xpose.msra.mxu0 0
    %799 = vmatprep.subr.bf16.mxu0 0
    %800 = vmatpush2.bf16.xpose.msra.mxu0 0
    %801 = vmatprep.subr.bf16.mxu0 0
    %802 = vmatpush2.bf16.xpose.msra.mxu0 0
    %803 = vmatprep.subr.bf16.mxu0 0
    %804 = vmatpush2.bf16.xpose.msra.mxu0 0
    %805 = vmatprep.mubr.bf16.mxu0 0
    %806 = vmatmul.mubr.bf16.gmra.mxu0 %v699
    %v807 = vpop.f32.mrf.mxu0
    %v808 = vadd.f32 0.0, %v807
    %v809 = vpop.f32.mrf.mxu0
    %v810 = vpop.f32.mrf.mxu0
    %v811 = vpop.f32.mrf.mxu0
    %812 = vdwg.mxu0
    %814 = vrot.lane.b32.xlu0 %v808, 16
    %v815 = vpop.permute.xlu0 %814
    %vm817 = vcmask 261248
    %818 = vst.msk [vmem:[#allocation2] sm:$0xff] %vm817, %v815
    %s819 = scalar_lea.vmem [#allocation9], 16
    %v820 = vld [vmem:[%s819] sm:$0xf]
    %v821 = vld [vmem:[%s819 + $0x4] sm:$0xf]
    %v824 = vunpack.c.l.b16 %v820
    %v825 = vunpack.c.l.b16 %v821
    %v826 = vpack.c.b16 %v825, %v824
    %828 = vmatprep.subr.bf16.mxu0 0
    %829 = vmatpush1.bf16.xpose.msra.mxu0 0
    %830 = vmatprep.subr.bf16.mxu0 0
    %831 = vmatpush1.bf16.xpose.msra.mxu0 0
    %832 = vmatprep.subr.bf16.mxu0 0
    %833 = vmatpush1.bf16.xpose.msra.mxu0 0
    %834 = vmatprep.subr.bf16.mxu0 0
    %835 = vmatpush1.bf16.xpose.msra.mxu0 0
    %836 = vmatprep.subr.bf16.mxu0 0
    %837 = vmatpush1.bf16.xpose.msra.mxu0 0
    %838 = vmatprep.subr.bf16.mxu0 0
    %839 = vmatpush1.bf16.xpose.msra.mxu0 0
    %840 = vmatprep.subr.bf16.mxu0 0
    %841 = vmatpush1.bf16.xpose.msra.mxu0 0
    %842 = vmatprep.subr.bf16.mxu0 0
    %843 = vmatpush1.bf16.xpose.msra.mxu0 %v826
    %844 = vmatprep.subr.bf16.mxu0 0
    %845 = vmatpush2.bf16.xpose.msra.mxu0 0
    %846 = vmatprep.subr.bf16.mxu0 0
    %847 = vmatpush2.bf16.xpose.msra.mxu0 0
    %848 = vmatprep.subr.bf16.mxu0 0
    %849 = vmatpush2.bf16.xpose.msra.mxu0 0
    %850 = vmatprep.subr.bf16.mxu0 0
    %851 = vmatpush2.bf16.xpose.msra.mxu0 0
    %852 = vmatprep.subr.bf16.mxu0 0
    %853 = vmatpush2.bf16.xpose.msra.mxu0 0
    %854 = vmatprep.subr.bf16.mxu0 0
    %855 = vmatpush2.bf16.xpose.msra.mxu0 0
    %856 = vmatprep.subr.bf16.mxu0 0
    %857 = vmatpush2.bf16.xpose.msra.mxu0 0
    %858 = vmatprep.subr.bf16.mxu0 0
    %859 = vmatpush2.bf16.xpose.msra.mxu0 0
    %860 = vmatprep.mubr.bf16.mxu0 0
    %861 = vmatmul.mubr.bf16.gmra.mxu0 %v700
    %v862 = vpop.f32.mrf.mxu0
    %v863 = vadd.f32 0.0, %v862
    %v864 = vpop.f32.mrf.mxu0
    %v865 = vpop.f32.mrf.mxu0
    %v866 = vpop.f32.mrf.mxu0
    %867 = vdwg.mxu0
    %869 = vrot.lane.b32.xlu0 %v863, 32
    %v870 = vpop.permute.xlu0 %869
    %vm872 = vcmask 392448
    %873 = vst.msk [vmem:[#allocation2] sm:$0xff] %vm872, %v870
    %s874 = scalar_lea.vmem [#allocation9], 24
    %v875 = vld [vmem:[%s874] sm:$0xf]
    %v876 = vld [vmem:[%s874 + $0x4] sm:$0xf]
    %v879 = vunpack.c.l.b16 %v875
    %v880 = vunpack.c.l.b16 %v876
    %v881 = vpack.c.b16 %v880, %v879
    %883 = vmatprep.subr.bf16.mxu0 0
    %884 = vmatpush1.bf16.xpose.msra.mxu0 0
    %885 = vmatprep.subr.bf16.mxu0 0
    %886 = vmatpush1.bf16.xpose.msra.mxu0 0
    %887 = vmatprep.subr.bf16.mxu0 0
    %888 = vmatpush1.bf16.xpose.msra.mxu0 0
    %889 = vmatprep.subr.bf16.mxu0 0
    %890 = vmatpush1.bf16.xpose.msra.mxu0 0
    %891 = vmatprep.subr.bf16.mxu0 0
    %892 = vmatpush1.bf16.xpose.msra.mxu0 0
    %893 = vmatprep.subr.bf16.mxu0 0
    %894 = vmatpush1.bf16.xpose.msra.mxu0 0
    %895 = vmatprep.subr.bf16.mxu0 0
    %896 = vmatpush1.bf16.xpose.msra.mxu0 0
    %897 = vmatprep.subr.bf16.mxu0 0
    %898 = vmatpush1.bf16.xpose.msra.mxu0 %v881
    %899 = vmatprep.subr.bf16.mxu0 0
    %900 = vmatpush2.bf16.xpose.msra.mxu0 0
    %901 = vmatprep.subr.bf16.mxu0 0
    %902 = vmatpush2.bf16.xpose.msra.mxu0 0
    %903 = vmatprep.subr.bf16.mxu0 0
    %904 = vmatpush2.bf16.xpose.msra.mxu0 0
    %905 = vmatprep.subr.bf16.mxu0 0
    %906 = vmatpush2.bf16.xpose.msra.mxu0 0
    %907 = vmatprep.subr.bf16.mxu0 0
    %908 = vmatpush2.bf16.xpose.msra.mxu0 0
    %909 = vmatprep.subr.bf16.mxu0 0
    %910 = vmatpush2.bf16.xpose.msra.mxu0 0
    %911 = vmatprep.subr.bf16.mxu0 0
    %912 = vmatpush2.bf16.xpose.msra.mxu0 0
    %913 = vmatprep.subr.bf16.mxu0 0
    %914 = vmatpush2.bf16.xpose.msra.mxu0 0
    %915 = vmatprep.mubr.bf16.mxu0 0
    %916 = vmatmul.mubr.bf16.gmra.mxu0 %v701
    %v917 = vpop.f32.mrf.mxu0
    %v918 = vadd.f32 0.0, %v917
    %v919 = vpop.f32.mrf.mxu0
    %v920 = vpop.f32.mrf.mxu0
    %v921 = vpop.f32.mrf.mxu0
    %922 = vdwg.mxu0
    %924 = vrot.lane.b32.xlu0 %v918, 48
    %v925 = vpop.permute.xlu0 %924
    %vm927 = vcmask 523648
    %928 = vst.msk [vmem:[#allocation2] sm:$0xff] %vm927, %v925
    %s929 = scalar_lea.vmem [#allocation9], 32
    %v930 = vld [vmem:[%s929] sm:$0xf]
    %v931 = vld [vmem:[%s929 + $0x4] sm:$0xf]
    %v934 = vunpack.c.l.b16 %v930
    %v935 = vunpack.c.l.b16 %v931
    %v936 = vpack.c.b16 %v935, %v934
    %938 = vmatprep.subr.bf16.mxu0 0
    %939 = vmatpush1.bf16.xpose.msra.mxu0 0
    %940 = vmatprep.subr.bf16.mxu0 0
    %941 = vmatpush1.bf16.xpose.msra.mxu0 0
    %942 = vmatprep.subr.bf16.mxu0 0
    %943 = vmatpush1.bf16.xpose.msra.mxu0 0
    %944 = vmatprep.subr.bf16.mxu0 0
    %945 = vmatpush1.bf16.xpose.msra.mxu0 0
    %946 = vmatprep.subr.bf16.mxu0 0
    %947 = vmatpush1.bf16.xpose.msra.mxu0 0
    %948 = vmatprep.subr.bf16.mxu0 0
    %949 = vmatpush1.bf16.xpose.msra.mxu0 0
    %950 = vmatprep.subr.bf16.mxu0 0
    %951 = vmatpush1.bf16.xpose.msra.mxu0 0
    %952 = vmatprep.subr.bf16.mxu0 0
    %953 = vmatpush1.bf16.xpose.msra.mxu0 %v936
    %954 = vmatprep.subr.bf16.mxu0 0
    %955 = vmatpush2.bf16.xpose.msra.mxu0 0
    %956 = vmatprep.subr.bf16.mxu0 0
    %957 = vmatpush2.bf16.xpose.msra.mxu0 0
    %958 = vmatprep.subr.bf16.mxu0 0
    %959 = vmatpush2.bf16.xpose.msra.mxu0 0
    %960 = vmatprep.subr.bf16.mxu0 0
    %961 = vmatpush2.bf16.xpose.msra.mxu0 0
    %962 = vmatprep.subr.bf16.mxu0 0
    %963 = vmatpush2.bf16.xpose.msra.mxu0 0
    %964 = vmatprep.subr.bf16.mxu0 0
    %965 = vmatpush2.bf16.xpose.msra.mxu0 0
    %966 = vmatprep.subr.bf16.mxu0 0
    %967 = vmatpush2.bf16.xpose.msra.mxu0 0
    %968 = vmatprep.subr.bf16.mxu0 0
    %969 = vmatpush2.bf16.xpose.msra.mxu0 0
    %970 = vmatprep.mubr.bf16.mxu0 0
    %971 = vmatmul.mubr.bf16.gmra.mxu0 %v702
    %v972 = vpop.f32.mrf.mxu0
    %v973 = vadd.f32 0.0, %v972
    %v974 = vpop.f32.mrf.mxu0
    %v975 = vpop.f32.mrf.mxu0
    %v976 = vpop.f32.mrf.mxu0
    %977 = vdwg.mxu0
    %979 = vrot.lane.b32.xlu0 %v973, 64
    %v980 = vpop.permute.xlu0 %979
    %vm982 = vcmask 654848
    %983 = vst.msk [vmem:[#allocation2] sm:$0xff] %vm982, %v980
    %s984 = scalar_lea.vmem [#allocation9], 40
    %v985 = vld [vmem:[%s984] sm:$0xf]
    %v986 = vld [vmem:[%s984 + $0x4] sm:$0xf]
    %v989 = vunpack.c.l.b16 %v985
    %v990 = vunpack.c.l.b16 %v986
    %v991 = vpack.c.b16 %v990, %v989
    %993 = vmatprep.subr.bf16.mxu0 0
    %994 = vmatpush1.bf16.xpose.msra.mxu0 0
    %995 = vmatprep.subr.bf16.mxu0 0
    %996 = vmatpush1.bf16.xpose.msra.mxu0 0
    %997 = vmatprep.subr.bf16.mxu0 0
    %998 = vmatpush1.bf16.xpose.msra.mxu0 0
    %999 = vmatprep.subr.bf16.mxu0 0
    %1000 = vmatpush1.bf16.xpose.msra.mxu0 0
    %1001 = vmatprep.subr.bf16.mxu0 0
    %1002 = vmatpush1.bf16.xpose.msra.mxu0 0
    %1003 = vmatprep.subr.bf16.mxu0 0
    %1004 = vmatpush1.bf16.xpose.msra.mxu0 0
    %1005 = vmatprep.subr.bf16.mxu0 0
    %1006 = vmatpush1.bf16.xpose.msra.mxu0 0
    %1007 = vmatprep.subr.bf16.mxu0 0
    %1008 = vmatpush1.bf16.xpose.msra.mxu0 %v991
    %1009 = vmatprep.subr.bf16.mxu0 0
    %1010 = vmatpush2.bf16.xpose.msra.mxu0 0
    %1011 = vmatprep.subr.bf16.mxu0 0
    %1012 = vmatpush2.bf16.xpose.msra.mxu0 0
    %1013 = vmatprep.subr.bf16.mxu0 0
    %1014 = vmatpush2.bf16.xpose.msra.mxu0 0
    %1015 = vmatprep.subr.bf16.mxu0 0
    %1016 = vmatpush2.bf16.xpose.msra.mxu0 0
    %1017 = vmatprep.subr.bf16.mxu0 0
    %1018 = vmatpush2.bf16.xpose.msra.mxu0 0
    %1019 = vmatprep.subr.bf16.mxu0 0
    %1020 = vmatpush2.bf16.xpose.msra.mxu0 0
    %1021 = vmatprep.subr.bf16.mxu0 0
    %1022 = vmatpush2.bf16.xpose.msra.mxu0 0
    %1023 = vmatprep.subr.bf16.mxu0 0
    %1024 = vmatpush2.bf16.xpose.msra.mxu0 0
    %1025 = vmatprep.mubr.bf16.mxu0 0
    %1026 = vmatmul.mubr.bf16.gmra.mxu0 %v703
    %v1027 = vpop.f32.mrf.mxu0
    %v1028 = vadd.f32 0.0, %v1027
    %v1029 = vpop.f32.mrf.mxu0
    %v1030 = vpop.f32.mrf.mxu0
    %v1031 = vpop.f32.mrf.mxu0
    %1032 = vdwg.mxu0
    %1034 = vrot.lane.b32.xlu0 %v1028, 80
    %v1035 = vpop.permute.xlu0 %1034
    %vm1037 = vcmask 786048
    %1038 = vst.msk [vmem:[#allocation2] sm:$0xff] %vm1037, %v1035
    %s1039 = scalar_lea.vmem [#allocation9], 48
    %v1040 = vld [vmem:[%s1039] sm:$0xf]
    %v1041 = vld [vmem:[%s1039 + $0x4] sm:$0xf]
    %v1044 = vunpack.c.l.b16 %v1040
    %v1045 = vunpack.c.l.b16 %v1041
    %v1046 = vpack.c.b16 %v1045, %v1044
    %1048 = vmatprep.subr.bf16.mxu0 0
    %1049 = vmatpush1.bf16.xpose.msra.mxu0 0
    %1050 = vmatprep.subr.bf16.mxu0 0
    %1051 = vmatpush1.bf16.xpose.msra.mxu0 0
    %1052 = vmatprep.subr.bf16.mxu0 0
    %1053 = vmatpush1.bf16.xpose.msra.mxu0 0
    %1054 = vmatprep.subr.bf16.mxu0 0
    %1055 = vmatpush1.bf16.xpose.msra.mxu0 0
    %1056 = vmatprep.subr.bf16.mxu0 0
    %1057 = vmatpush1.bf16.xpose.msra.mxu0 0
    %1058 = vmatprep.subr.bf16.mxu0 0
    %1059 = vmatpush1.bf16.xpose.msra.mxu0 0
    %1060 = vmatprep.subr.bf16.mxu0 0
    %1061 = vmatpush1.bf16.xpose.msra.mxu0 0
    %1062 = vmatprep.subr.bf16.mxu0 0
    %1063 = vmatpush1.bf16.xpose.msra.mxu0 %v1046
    %1064 = vmatprep.subr.bf16.mxu0 0
    %1065 = vmatpush2.bf16.xpose.msra.mxu0 0
    %1066 = vmatprep.subr.bf16.mxu0 0
    %1067 = vmatpush2.bf16.xpose.msra.mxu0 0
    %1068 = vmatprep.subr.bf16.mxu0 0
    %1069 = vmatpush2.bf16.xpose.msra.mxu0 0
    %1070 = vmatprep.subr.bf16.mxu0 0
    %1071 = vmatpush2.bf16.xpose.msra.mxu0 0
    %1072 = vmatprep.subr.bf16.mxu0 0
    %1073 = vmatpush2.bf16.xpose.msra.mxu0 0
    %1074 = vmatprep.subr.bf16.mxu0 0
    %1075 = vmatpush2.bf16.xpose.msra.mxu0 0
    %1076 = vmatprep.subr.bf16.mxu0 0
    %1077 = vmatpush2.bf16.xpose.msra.mxu0 0
    %1078 = vmatprep.subr.bf16.mxu0 0
    %1079 = vmatpush2.bf16.xpose.msra.mxu0 0
    %1080 = vmatprep.mubr.bf16.mxu0 0
    %1081 = vmatmul.mubr.bf16.gmra.mxu0 %v704
    %v1082 = vpop.f32.mrf.mxu0
    %v1083 = vadd.f32 0.0, %v1082
    %v1084 = vpop.f32.mrf.mxu0
    %v1085 = vpop.f32.mrf.mxu0
    %v1086 = vpop.f32.mrf.mxu0
    %1087 = vdwg.mxu0
    %1089 = vrot.lane.b32.xlu0 %v1083, 96
    %v1090 = vpop.permute.xlu0 %1089
    %vm1092 = vcmask 917248
    %1093 = vst.msk [vmem:[#allocation2] sm:$0xff] %vm1092, %v1090
    %s1094 = scalar_lea.vmem [#allocation9], 56
    %v1095 = vld [vmem:[%s1094] sm:$0xf]
    %v1096 = vld [vmem:[%s1094 + $0x4] sm:$0xf]
    %v1099 = vunpack.c.l.b16 %v1095
    %v1100 = vunpack.c.l.b16 %v1096
    %v1101 = vpack.c.b16 %v1100, %v1099
    %1103 = vmatprep.subr.bf16.mxu0 0
    %1104 = vmatpush1.bf16.xpose.msra.mxu0 0
    %1105 = vmatprep.subr.bf16.mxu0 0
    %1106 = vmatpush1.bf16.xpose.msra.mxu0 0
    %1107 = vmatprep.subr.bf16.mxu0 0
    %1108 = vmatpush1.bf16.xpose.msra.mxu0 0
    %1109 = vmatprep.subr.bf16.mxu0 0
    %1110 = vmatpush1.bf16.xpose.msra.mxu0 0
    %1111 = vmatprep.subr.bf16.mxu0 0
    %1112 = vmatpush1.bf16.xpose.msra.mxu0 0
    %1113 = vmatprep.subr.bf16.mxu0 0
    %1114 = vmatpush1.bf16.xpose.msra.mxu0 0
    %1115 = vmatprep.subr.bf16.mxu0 0
    %1116 = vmatpush1.bf16.xpose.msra.mxu0 0
    %1117 = vmatprep.subr.bf16.mxu0 0
    %1118 = vmatpush1.bf16.xpose.msra.mxu0 %v1101
    %1119 = vmatprep.subr.bf16.mxu0 0
    %1120 = vmatpush2.bf16.xpose.msra.mxu0 0
    %1121 = vmatprep.subr.bf16.mxu0 0
    %1122 = vmatpush2.bf16.xpose.msra.mxu0 0
    %1123 = vmatprep.subr.bf16.mxu0 0
    %1124 = vmatpush2.bf16.xpose.msra.mxu0 0
    %1125 = vmatprep.subr.bf16.mxu0 0
    %1126 = vmatpush2.bf16.xpose.msra.mxu0 0
    %1127 = vmatprep.subr.bf16.mxu0 0
    %1128 = vmatpush2.bf16.xpose.msra.mxu0 0
    %1129 = vmatprep.subr.bf16.mxu0 0
    %1130 = vmatpush2.bf16.xpose.msra.mxu0 0
    %1131 = vmatprep.subr.bf16.mxu0 0
    %1132 = vmatpush2.bf16.xpose.msra.mxu0 0
    %1133 = vmatprep.subr.bf16.mxu0 0
    %1134 = vmatpush2.bf16.xpose.msra.mxu0 0
    %1135 = vmatprep.mubr.bf16.mxu0 0
    %1136 = vmatmul.mubr.bf16.gmra.mxu0 %v705
    %v1137 = vpop.f32.mrf.mxu0
    %v1138 = vadd.f32 0.0, %v1137
    %v1139 = vpop.f32.mrf.mxu0
    %v1140 = vpop.f32.mrf.mxu0
    %v1141 = vpop.f32.mrf.mxu0
    %1142 = vdwg.mxu0
    %1144 = vrot.lane.b32.xlu0 %v1138, 112
    %v1145 = vpop.permute.xlu0 %1144
    %vm1147 = vcmask 1048448
    %1148 = vst.msk [vmem:[#allocation2] sm:$0xff] %vm1147, %v1145
    %s1149 = scalar_lea.vmem [#allocation9], 64
    %v1150 = vld [vmem:[%s1149] sm:$0xf]
    %v1151 = vld [vmem:[%s1149 + $0x4] sm:$0xf]
    %v1154 = vunpack.c.l.b16 %v1150
    %v1155 = vunpack.c.l.b16 %v1151
    %v1156 = vpack.c.b16 %v1155, %v1154
    %1158 = vmatprep.subr.bf16.mxu0 0
    %1159 = vmatpush1.bf16.xpose.msra.mxu0 0
    %1160 = vmatprep.subr.bf16.mxu0 0
    %1161 = vmatpush1.bf16.xpose.msra.mxu0 0
    %1162 = vmatprep.subr.bf16.mxu0 0
    %1163 = vmatpush1.bf16.xpose.msra.mxu0 0
    %1164 = vmatprep.subr.bf16.mxu0 0
    %1165 = vmatpush1.bf16.xpose.msra.mxu0 0
    %1166 = vmatprep.subr.bf16.mxu0 0
    %1167 = vmatpush1.bf16.xpose.msra.mxu0 0
    %1168 = vmatprep.subr.bf16.mxu0 0
    %1169 = vmatpush1.bf16.xpose.msra.mxu0 0
    %1170 = vmatprep.subr.bf16.mxu0 0
    %1171 = vmatpush1.bf16.xpose.msra.mxu0 0
    %1172 = vmatprep.subr.bf16.mxu0 0
    %1173 = vmatpush1.bf16.xpose.msra.mxu0 %v1156
    %1174 = vmatprep.subr.bf16.mxu0 0
    %1175 = vmatpush2.bf16.xpose.msra.mxu0 0
    %1176 = vmatprep.subr.bf16.mxu0 0
    %1177 = vmatpush2.bf16.xpose.msra.mxu0 0
    %1178 = vmatprep.subr.bf16.mxu0 0
    %1179 = vmatpush2.bf16.xpose.msra.mxu0 0
    %1180 = vmatprep.subr.bf16.mxu0 0
    %1181 = vmatpush2.bf16.xpose.msra.mxu0 0
    %1182 = vmatprep.subr.bf16.mxu0 0
    %1183 = vmatpush2.bf16.xpose.msra.mxu0 0
    %1184 = vmatprep.subr.bf16.mxu0 0
    %1185 = vmatpush2.bf16.xpose.msra.mxu0 0
    %1186 = vmatprep.subr.bf16.mxu0 0
    %1187 = vmatpush2.bf16.xpose.msra.mxu0 0
    %1188 = vmatprep.subr.bf16.mxu0 0
    %1189 = vmatpush2.bf16.xpose.msra.mxu0 0
    %1190 = vmatprep.mubr.bf16.mxu0 0
    %1191 = vmatmul.mubr.bf16.gmra.mxu0 %v706
    %v1192 = vpop.f32.mrf.mxu0
    %v1193 = vadd.f32 0.0, %v1192
    %v1194 = vpop.f32.mrf.mxu0
    %v1195 = vpop.f32.mrf.mxu0
    %v1196 = vpop.f32.mrf.mxu0
    %1197 = vdwg.mxu0
    %1198 = vst.msk [vmem:[#allocation2 + $0x8] sm:$0xff] %vm762, %v1193
    %s1199 = scalar_lea.vmem [#allocation9], 72
    %v1200 = vld [vmem:[%s1199] sm:$0xf]
    %v1201 = vld [vmem:[%s1199 + $0x4] sm:$0xf]
    %v1204 = vunpack.c.l.b16 %v1200
    %v1205 = vunpack.c.l.b16 %v1201
    %v1206 = vpack.c.b16 %v1205, %v1204
    %1208 = vmatprep.subr.bf16.mxu0 0
    %1209 = vmatpush1.bf16.xpose.msra.mxu0 0
    %1210 = vmatprep.subr.bf16.mxu0 0
    %1211 = vmatpush1.bf16.xpose.msra.mxu0 0
    %1212 = vmatprep.subr.bf16.mxu0 0
    %1213 = vmatpush1.bf16.xpose.msra.mxu0 0
    %1214 = vmatprep.subr.bf16.mxu0 0
    %1215 = vmatpush1.bf16.xpose.msra.mxu0 0
    %1216 = vmatprep.subr.bf16.mxu0 0
    %1217 = vmatpush1.bf16.xpose.msra.mxu0 0
    %1218 = vmatprep.subr.bf16.mxu0 0
    %1219 = vmatpush1.bf16.xpose.msra.mxu0 0
    %1220 = vmatprep.subr.bf16.mxu0 0
    %1221 = vmatpush1.bf16.xpose.msra.mxu0 0
    %1222 = vmatprep.subr.bf16.mxu0 0
    %1223 = vmatpush1.bf16.xpose.msra.mxu0 %v1206
    %1224 = vmatprep.subr.bf16.mxu0 0
    %1225 = vmatpush2.bf16.xpose.msra.mxu0 0
    %1226 = vmatprep.subr.bf16.mxu0 0
    %1227 = vmatpush2.bf16.xpose.msra.mxu0 0
    %1228 = vmatprep.subr.bf16.mxu0 0
    %1229 = vmatpush2.bf16.xpose.msra.mxu0 0
    %1230 = vmatprep.subr.bf16.mxu0 0
    %1231 = vmatpush2.bf16.xpose.msra.mxu0 0
    %1232 = vmatprep.subr.bf16.mxu0 0
    %1233 = vmatpush2.bf16.xpose.msra.mxu0 0
    %1234 = vmatprep.subr.bf16.mxu0 0
    %1235 = vmatpush2.bf16.xpose.msra.mxu0 0
    %1236 = vmatprep.subr.bf16.mxu0 0
    %1237 = vmatpush2.bf16.xpose.msra.mxu0 0
    %1238 = vmatprep.subr.bf16.mxu0 0
    %1239 = vmatpush2.bf16.xpose.msra.mxu0 0
    %1240 = vmatprep.mubr.bf16.mxu0 0
    %1241 = vmatmul.mubr.bf16.gmra.mxu0 %v707
    %v1242 = vpop.f32.mrf.mxu0
    %v1243 = vadd.f32 0.0, %v1242
    %v1244 = vpop.f32.mrf.mxu0
    %v1245 = vpop.f32.mrf.mxu0
    %v1246 = vpop.f32.mrf.mxu0
    %1247 = vdwg.mxu0
    %1249 = vrot.lane.b32.xlu0 %v1243, 16
    %v1250 = vpop.permute.xlu0 %1249
    %1252 = vst.msk [vmem:[#allocation2 + $0x8] sm:$0xff] %vm817, %v1250
    %s1253 = scalar_lea.vmem [#allocation9], 80
    %v1254 = vld [vmem:[%s1253] sm:$0xf]
    %v1255 = vld [vmem:[%s1253 + $0x4] sm:$0xf]
    %v1258 = vunpack.c.l.b16 %v1254
    %v1259 = vunpack.c.l.b16 %v1255
    %v1260 = vpack.c.b16 %v1259, %v1258
    %1262 = vmatprep.subr.bf16.mxu0 0
    %1263 = vmatpush1.bf16.xpose.msra.mxu0 0
    %1264 = vmatprep.subr.bf16.mxu0 0
    %1265 = vmatpush1.bf16.xpose.msra.mxu0 0
    %1266 = vmatprep.subr.bf16.mxu0 0
    %1267 = vmatpush1.bf16.xpose.msra.mxu0 0
    %1268 = vmatprep.subr.bf16.mxu0 0
    %1269 = vmatpush1.bf16.xpose.msra.mxu0 0
    %1270 = vmatprep.subr.bf16.mxu0 0
    %1271 = vmatpush1.bf16.xpose.msra.mxu0 0
    %1272 = vmatprep.subr.bf16.mxu0 0
    %1273 = vmatpush1.bf16.xpose.msra.mxu0 0
    %1274 = vmatprep.subr.bf16.mxu0 0
    %1275 = vmatpush1.bf16.xpose.msra.mxu0 0
    %1276 = vmatprep.subr.bf16.mxu0 0
    %1277 = vmatpush1.bf16.xpose.msra.mxu0 %v1260
    %1278 = vmatprep.subr.bf16.mxu0 0
    %1279 = vmatpush2.bf16.xpose.msra.mxu0 0
    %1280 = vmatprep.subr.bf16.mxu0 0
    %1281 = vmatpush2.bf16.xpose.msra.mxu0 0
    %1282 = vmatprep.subr.bf16.mxu0 0
    %1283 = vmatpush2.bf16.xpose.msra.mxu0 0
    %1284 = vmatprep.subr.bf16.mxu0 0
    %1285 = vmatpush2.bf16.xpose.msra.mxu0 0
    %1286 = vmatprep.subr.bf16.mxu0 0
    %1287 = vmatpush2.bf16.xpose.msra.mxu0 0
    %1288 = vmatprep.subr.bf16.mxu0 0
    %1289 = vmatpush2.bf16.xpose.msra.mxu0 0
    %1290 = vmatprep.subr.bf16.mxu0 0
    %1291 = vmatpush2.bf16.xpose.msra.mxu0 0
    %1292 = vmatprep.subr.bf16.mxu0 0
    %1293 = vmatpush2.bf16.xpose.msra.mxu0 0
    %1294 = vmatprep.mubr.bf16.mxu0 0
    %1295 = vmatmul.mubr.bf16.gmra.mxu0 %v708
    %v1296 = vpop.f32.mrf.mxu0
    %v1297 = vadd.f32 0.0, %v1296
    %v1298 = vpop.f32.mrf.mxu0
    %v1299 = vpop.f32.mrf.mxu0
    %v1300 = vpop.f32.mrf.mxu0
    %1301 = vdwg.mxu0
    %1303 = vrot.lane.b32.xlu0 %v1297, 32
    %v1304 = vpop.permute.xlu0 %1303
    %1306 = vst.msk [vmem:[#allocation2 + $0x8] sm:$0xff] %vm872, %v1304
    %s1307 = scalar_lea.vmem [#allocation9], 88
    %v1308 = vld [vmem:[%s1307] sm:$0xf]
    %v1309 = vld [vmem:[%s1307 + $0x4] sm:$0xf]
    %v1312 = vunpack.c.l.b16 %v1308
    %v1313 = vunpack.c.l.b16 %v1309
    %v1314 = vpack.c.b16 %v1313, %v1312
    %1316 = vmatprep.subr.bf16.mxu0 0
    %1317 = vmatpush1.bf16.xpose.msra.mxu0 0
    %1318 = vmatprep.subr.bf16.mxu0 0
    %1319 = vmatpush1.bf16.xpose.msra.mxu0 0
    %1320 = vmatprep.subr.bf16.mxu0 0
    %1321 = vmatpush1.bf16.xpose.msra.mxu0 0
    %1322 = vmatprep.subr.bf16.mxu0 0
    %1323 = vmatpush1.bf16.xpose.msra.mxu0 0
    %1324 = vmatprep.subr.bf16.mxu0 0
    %1325 = vmatpush1.bf16.xpose.msra.mxu0 0
    %1326 = vmatprep.subr.bf16.mxu0 0
    %1327 = vmatpush1.bf16.xpose.msra.mxu0 0
    %1328 = vmatprep.subr.bf16.mxu0 0
    %1329 = vmatpush1.bf16.xpose.msra.mxu0 0
    %1330 = vmatprep.subr.bf16.mxu0 0
    %1331 = vmatpush1.bf16.xpose.msra.mxu0 %v1314
    %1332 = vmatprep.subr.bf16.mxu0 0
    %1333 = vmatpush2.bf16.xpose.msra.mxu0 0
    %1334 = vmatprep.subr.bf16.mxu0 0
    %1335 = vmatpush2.bf16.xpose.msra.mxu0 0
    %1336 = vmatprep.subr.bf16.mxu0 0
    %1337 = vmatpush2.bf16.xpose.msra.mxu0 0
    %1338 = vmatprep.subr.bf16.mxu0 0
    %1339 = vmatpush2.bf16.xpose.msra.mxu0 0
    %1340 = vmatprep.subr.bf16.mxu0 0
    %1341 = vmatpush2.bf16.xpose.msra.mxu0 0
    %1342 = vmatprep.subr.bf16.mxu0 0
    %1343 = vmatpush2.bf16.xpose.msra.mxu0 0
    %1344 = vmatprep.subr.bf16.mxu0 0
    %1345 = vmatpush2.bf16.xpose.msra.mxu0 0
    %1346 = vmatprep.subr.bf16.mxu0 0
    %1347 = vmatpush2.bf16.xpose.msra.mxu0 0
    %1348 = vmatprep.mubr.bf16.mxu0 0
    %1349 = vmatmul.mubr.bf16.gmra.mxu0 %v709
    %v1350 = vpop.f32.mrf.mxu0
    %v1351 = vadd.f32 0.0, %v1350
    %v1352 = vpop.f32.mrf.mxu0
    %v1353 = vpop.f32.mrf.mxu0
    %v1354 = vpop.f32.mrf.mxu0
    %1355 = vdwg.mxu0
    %1357 = vrot.lane.b32.xlu0 %v1351, 48
    %v1358 = vpop.permute.xlu0 %1357
    %1360 = vst.msk [vmem:[#allocation2 + $0x8] sm:$0xff] %vm927, %v1358
    %s1361 = scalar_lea.vmem [#allocation9], 96
    %v1362 = vld [vmem:[%s1361] sm:$0xf]
    %v1363 = vld [vmem:[%s1361 + $0x4] sm:$0xf]
    %v1366 = vunpack.c.l.b16 %v1362
    %v1367 = vunpack.c.l.b16 %v1363
    %v1368 = vpack.c.b16 %v1367, %v1366
    %1370 = vmatprep.subr.bf16.mxu0 0
    %1371 = vmatpush1.bf16.xpose.msra.mxu0 0
    %1372 = vmatprep.subr.bf16.mxu0 0
    %1373 = vmatpush1.bf16.xpose.msra.mxu0 0
    %1374 = vmatprep.subr.bf16.mxu0 0
    %1375 = vmatpush1.bf16.xpose.msra.mxu0 0
    %1376 = vmatprep.subr.bf16.mxu0 0
    %1377 = vmatpush1.bf16.xpose.msra.mxu0 0
    %1378 = vmatprep.subr.bf16.mxu0 0
    %1379 = vmatpush1.bf16.xpose.msra.mxu0 0
    %1380 = vmatprep.subr.bf16.mxu0 0
    %1381 = vmatpush1.bf16.xpose.msra.mxu0 0
    %1382 = vmatprep.subr.bf16.mxu0 0
    %1383 = vmatpush1.bf16.xpose.msra.mxu0 0
    %1384 = vmatprep.subr.bf16.mxu0 0
    %1385 = vmatpush1.bf16.xpose.msra.mxu0 %v1368
    %1386 = vmatprep.subr.bf16.mxu0 0
    %1387 = vmatpush2.bf16.xpose.msra.mxu0 0
    %1388 = vmatprep.subr.bf16.mxu0 0
    %1389 = vmatpush2.bf16.xpose.msra.mxu0 0
    %1390 = vmatprep.subr.bf16.mxu0 0
    %1391 = vmatpush2.bf16.xpose.msra.mxu0 0
    %1392 = vmatprep.subr.bf16.mxu0 0
    %1393 = vmatpush2.bf16.xpose.msra.mxu0 0
    %1394 = vmatprep.subr.bf16.mxu0 0
    %1395 = vmatpush2.bf16.xpose.msra.mxu0 0
    %1396 = vmatprep.subr.bf16.mxu0 0
    %1397 = vmatpush2.bf16.xpose.msra.mxu0 0
    %1398 = vmatprep.subr.bf16.mxu0 0
    %1399 = vmatpush2.bf16.xpose.msra.mxu0 0
    %1400 = vmatprep.subr.bf16.mxu0 0
    %1401 = vmatpush2.bf16.xpose.msra.mxu0 0
    %1402 = vmatprep.mubr.bf16.mxu0 0
    %1403 = vmatmul.mubr.bf16.gmra.mxu0 %v710
    %v1404 = vpop.f32.mrf.mxu0
    %v1405 = vadd.f32 0.0, %v1404
    %v1406 = vpop.f32.mrf.mxu0
    %v1407 = vpop.f32.mrf.mxu0
    %v1408 = vpop.f32.mrf.mxu0
    %1409 = vdwg.mxu0
    %1411 = vrot.lane.b32.xlu0 %v1405, 64
    %v1412 = vpop.permute.xlu0 %1411
    %1414 = vst.msk [vmem:[#allocation2 + $0x8] sm:$0xff] %vm982, %v1412
    %s1415 = scalar_lea.vmem [#allocation9], 104
    %v1416 = vld [vmem:[%s1415] sm:$0xf]
    %v1417 = vld [vmem:[%s1415 + $0x4] sm:$0xf]
    %v1420 = vunpack.c.l.b16 %v1416
    %v1421 = vunpack.c.l.b16 %v1417
    %v1422 = vpack.c.b16 %v1421, %v1420
    %1424 = vmatprep.subr.bf16.mxu0 0
    %1425 = vmatpush1.bf16.xpose.msra.mxu0 0
    %1426 = vmatprep.subr.bf16.mxu0 0
    %1427 = vmatpush1.bf16.xpose.msra.mxu0 0
    %1428 = vmatprep.subr.bf16.mxu0 0
    %1429 = vmatpush1.bf16.xpose.msra.mxu0 0
    %1430 = vmatprep.subr.bf16.mxu0 0
    %1431 = vmatpush1.bf16.xpose.msra.mxu0 0
    %1432 = vmatprep.subr.bf16.mxu0 0
    %1433 = vmatpush1.bf16.xpose.msra.mxu0 0
    %1434 = vmatprep.subr.bf16.mxu0 0
    %1435 = vmatpush1.bf16.xpose.msra.mxu0 0
    %1436 = vmatprep.subr.bf16.mxu0 0
    %1437 = vmatpush1.bf16.xpose.msra.mxu0 0
    %1438 = vmatprep.subr.bf16.mxu0 0
    %1439 = vmatpush1.bf16.xpose.msra.mxu0 %v1422
    %1440 = vmatprep.subr.bf16.mxu0 0
    %1441 = vmatpush2.bf16.xpose.msra.mxu0 0
    %1442 = vmatprep.subr.bf16.mxu0 0
    %1443 = vmatpush2.bf16.xpose.msra.mxu0 0
    %1444 = vmatprep.subr.bf16.mxu0 0
    %1445 = vmatpush2.bf16.xpose.msra.mxu0 0
    %1446 = vmatprep.subr.bf16.mxu0 0
    %1447 = vmatpush2.bf16.xpose.msra.mxu0 0
    %1448 = vmatprep.subr.bf16.mxu0 0
    %1449 = vmatpush2.bf16.xpose.msra.mxu0 0
    %1450 = vmatprep.subr.bf16.mxu0 0
    %1451 = vmatpush2.bf16.xpose.msra.mxu0 0
    %1452 = vmatprep.subr.bf16.mxu0 0
    %1453 = vmatpush2.bf16.xpose.msra.mxu0 0
    %1454 = vmatprep.subr.bf16.mxu0 0
    %1455 = vmatpush2.bf16.xpose.msra.mxu0 0
    %1456 = vmatprep.mubr.bf16.mxu0 0
    %1457 = vmatmul.mubr.bf16.gmra.mxu0 %v711
    %v1458 = vpop.f32.mrf.mxu0
    %v1459 = vadd.f32 0.0, %v1458
    %v1460 = vpop.f32.mrf.mxu0
    %v1461 = vpop.f32.mrf.mxu0
    %v1462 = vpop.f32.mrf.mxu0
    %1463 = vdwg.mxu0
    %1465 = vrot.lane.b32.xlu0 %v1459, 80
    %v1466 = vpop.permute.xlu0 %1465
    %1468 = vst.msk [vmem:[#allocation2 + $0x8] sm:$0xff] %vm1037, %v1466
    %s1469 = scalar_lea.vmem [#allocation9], 112
    %v1470 = vld [vmem:[%s1469] sm:$0xf]
    %v1471 = vld [vmem:[%s1469 + $0x4] sm:$0xf]
    %v1474 = vunpack.c.l.b16 %v1470
    %v1475 = vunpack.c.l.b16 %v1471
    %v1476 = vpack.c.b16 %v1475, %v1474
    %1478 = vmatprep.subr.bf16.mxu0 0
    %1479 = vmatpush1.bf16.xpose.msra.mxu0 0
    %1480 = vmatprep.subr.bf16.mxu0 0
    %1481 = vmatpush1.bf16.xpose.msra.mxu0 0
    %1482 = vmatprep.subr.bf16.mxu0 0
    %1483 = vmatpush1.bf16.xpose.msra.mxu0 0
    %1484 = vmatprep.subr.bf16.mxu0 0
    %1485 = vmatpush1.bf16.xpose.msra.mxu0 0
    %1486 = vmatprep.subr.bf16.mxu0 0
    %1487 = vmatpush1.bf16.xpose.msra.mxu0 0
    %1488 = vmatprep.subr.bf16.mxu0 0
    %1489 = vmatpush1.bf16.xpose.msra.mxu0 0
    %1490 = vmatprep.subr.bf16.mxu0 0
    %1491 = vmatpush1.bf16.xpose.msra.mxu0 0
    %1492 = vmatprep.subr.bf16.mxu0 0
    %1493 = vmatpush1.bf16.xpose.msra.mxu0 %v1476
    %1494 = vmatprep.subr.bf16.mxu0 0
    %1495 = vmatpush2.bf16.xpose.msra.mxu0 0
    %1496 = vmatprep.subr.bf16.mxu0 0
    %1497 = vmatpush2.bf16.xpose.msra.mxu0 0
    %1498 = vmatprep.subr.bf16.mxu0 0
    %1499 = vmatpush2.bf16.xpose.msra.mxu0 0
    %1500 = vmatprep.subr.bf16.mxu0 0
    %1501 = vmatpush2.bf16.xpose.msra.mxu0 0
    %1502 = vmatprep.subr.bf16.mxu0 0
    %1503 = vmatpush2.bf16.xpose.msra.mxu0 0
    %1504 = vmatprep.subr.bf16.mxu0 0
    %1505 = vmatpush2.bf16.xpose.msra.mxu0 0
    %1506 = vmatprep.subr.bf16.mxu0 0
    %1507 = vmatpush2.bf16.xpose.msra.mxu0 0
    %1508 = vmatprep.subr.bf16.mxu0 0
    %1509 = vmatpush2.bf16.xpose.msra.mxu0 0
    %1510 = vmatprep.mubr.bf16.mxu0 0
    %1511 = vmatmul.mubr.bf16.gmra.mxu0 %v712
    %v1512 = vpop.f32.mrf.mxu0
    %v1513 = vadd.f32 0.0, %v1512
    %v1514 = vpop.f32.mrf.mxu0
    %v1515 = vpop.f32.mrf.mxu0
    %v1516 = vpop.f32.mrf.mxu0
    %1517 = vdwg.mxu0
    %1519 = vrot.lane.b32.xlu0 %v1513, 96
    %v1520 = vpop.permute.xlu0 %1519
    %1522 = vst.msk [vmem:[#allocation2 + $0x8] sm:$0xff] %vm1092, %v1520
    %s1523 = scalar_lea.vmem [#allocation9], 120
    %v1524 = vld [vmem:[%s1523] sm:$0xf]
    %v1525 = vld [vmem:[%s1523 + $0x4] sm:$0xf]
    %v1528 = vunpack.c.l.b16 %v1524
    %v1529 = vunpack.c.l.b16 %v1525
    %v1530 = vpack.c.b16 %v1529, %v1528
    %1532 = vmatprep.subr.bf16.mxu0 0
    %1533 = vmatpush1.bf16.xpose.msra.mxu0 0
    %1534 = vmatprep.subr.bf16.mxu0 0
    %1535 = vmatpush1.bf16.xpose.msra.mxu0 0
    %1536 = vmatprep.subr.bf16.mxu0 0
    %1537 = vmatpush1.bf16.xpose.msra.mxu0 0
    %1538 = vmatprep.subr.bf16.mxu0 0
    %1539 = vmatpush1.bf16.xpose.msra.mxu0 0
    %1540 = vmatprep.subr.bf16.mxu0 0
    %1541 = vmatpush1.bf16.xpose.msra.mxu0 0
    %1542 = vmatprep.subr.bf16.mxu0 0
    %1543 = vmatpush1.bf16.xpose.msra.mxu0 0
    %1544 = vmatprep.subr.bf16.mxu0 0
    %1545 = vmatpush1.bf16.xpose.msra.mxu0 0
    %1546 = vmatprep.subr.bf16.mxu0 0
    %1547 = vmatpush1.bf16.xpose.msra.mxu0 %v1530
    %1548 = vmatprep.subr.bf16.mxu0 0
    %1549 = vmatpush2.bf16.xpose.msra.mxu0 0
    %1550 = vmatprep.subr.bf16.mxu0 0
    %1551 = vmatpush2.bf16.xpose.msra.mxu0 0
    %1552 = vmatprep.subr.bf16.mxu0 0
    %1553 = vmatpush2.bf16.xpose.msra.mxu0 0
    %1554 = vmatprep.subr.bf16.mxu0 0
    %1555 = vmatpush2.bf16.xpose.msra.mxu0 0
    %1556 = vmatprep.subr.bf16.mxu0 0
    %1557 = vmatpush2.bf16.xpose.msra.mxu0 0
    %1558 = vmatprep.subr.bf16.mxu0 0
    %1559 = vmatpush2.bf16.xpose.msra.mxu0 0
    %1560 = vmatprep.subr.bf16.mxu0 0
    %1561 = vmatpush2.bf16.xpose.msra.mxu0 0
    %1562 = vmatprep.subr.bf16.mxu0 0
    %1563 = vmatpush2.bf16.xpose.msra.mxu0 0
    %1564 = vmatprep.mubr.bf16.mxu0 0
    %1565 = vmatmul.mubr.bf16.gmra.mxu0 %v713
    %v1566 = vpop.f32.mrf.mxu0
    %v1567 = vadd.f32 0.0, %v1566
    %v1568 = vpop.f32.mrf.mxu0
    %v1569 = vpop.f32.mrf.mxu0
    %v1570 = vpop.f32.mrf.mxu0
    %1571 = vdwg.mxu0
    %1573 = vrot.lane.b32.xlu0 %v1567, 112
    %v1574 = vpop.permute.xlu0 %1573
    %1576 = vst.msk [vmem:[#allocation2 + $0x8] sm:$0xff] %vm1147, %v1574
    %v1577 = vld [vmem:[#allocation2] sm:$0xff]
    %v1578 = vld [vmem:[#allocation2 + $0x8] sm:$0xff]
    %v1579 = vld [vmem:[%s4] sm:$0x3]
    %v1581 = vlaneseq
    %v1582 = vshrl.u32 %v1581, 7
    %v1583 = vsub.s32 0, %v1582
    %v1584 = vrot.slane %v1579, %v1583
    %v1585 = vlaneseq
    %v1586 = vshrl.u32 %v1585, 7
    %v1587 = vsub.s32 1, %v1586
    %v1588 = vrot.slane %v1579, %v1587
    %v1591 = vadd.f32 %v1577, %v1584
    %v1592 = vadd.f32 %v1578, %v1588
    %1593 = vst [vmem:[#allocation11] sm:$0xff] %v1591
    %1594 = vst [vmem:[#allocation11 + $0x8] sm:$0xff] %v1592
    // Predicated region
    $region38: #{tpu_custom_call.1} parent=1 // pred_check
      _
    $region39: #{tpu_custom_call.1} parent=1 // pred_check_branch
      %1596 = sbr.rel (0) target = $region41
    $region40: #{tpu_custom_call.1} parent=1 // pred_region
      %s1598 = ssub.s32 256, 256
      %1599 = vsyncadd [#allocation5], %s1598
      %s1601 = sshll.u32 [#allocation11], 4
      %s1602 = int_to_ptr.vmem [resolvable:$true] %s1601
      %1604 = dma.vmem_to_hbm [thread:$0]  %s1602, 256, %s5, [#allocation5]
    $region41: #{tpu_custom_call.1} parent=1 // pred_fallthru
      _
    // Predicated region
    $region42: #{tpu_custom_call.1} parent=1 // pred_check
      _
    $region43: #{tpu_custom_call.1} parent=1 // pred_check_branch
      %1606 = sbr.rel (0) target = $region45
    $region44: #{tpu_custom_call.1} parent=1 // pred_region
      %1607 = dma.done [#allocation5], 256
    $region45: #{tpu_custom_call.1} parent=1 // pred_fallthru
      _
    %1608 = vsyncpa [#allocation4], 1
    %1609 = vsyncpa [#allocation7], 1
    %1610 = vsyncpa [#allocation10], 1
    %1611 = vsyncpa [#allocation5], 1

</llo_original>
